<compile_context>
chip_gen: v7x
topology: tpu7x:2x2x1
jax: 0.10.0
libtpu: 0.0.40
codegen_flags: <defaults>
</compile_context>

<pallas_src>
import functools
import numpy as np
import jax
import jax.numpy as jnp
from jax.experimental import pallas as pl
from jax.experimental.pallas import tpu as pltpu

_LAYER_ORDER = ("enc_1", "enc_2", "enc_3", "z_layer",
                "dec_1", "dec_2", "dec_3", "x_bar",
                "proj1", "proj2", "proj3", "proj4", "proj5")
_LANE = 128


def _round_up(a, m):
    return ((a + m - 1) // m) * m


def _full_spec(shape):
    # whole-array block, single grid step
    return pl.BlockSpec(shape, lambda i: (0,) * len(shape))


# ----------------------------------------------------------------------------
# The fused forward kernel
# ----------------------------------------------------------------------------
def _fused_sdcn_kernel(x_ref, agg_ref, srcdst_ref, wslab_ref, bslab_ref,
                       wedge_ref, mu_t_ref, node_out_ref, edge_out_ref,
                       *, sigma, v, layers, n_nodes, n_edges, n_z, edge_dim):
    # layers: tuple of (row_offset_in_wslab, in_dim, out_dim), static Python ints.

    def lin(xv, idx, relu):
        off, din, dout = layers[idx]
        w = wslab_ref[off:off + din, :dout]          # bf16 (pre-cast host-side)
        b = bslab_ref[idx:idx + 1, :dout]            # f32 (1, dout)
        y = jnp.dot(xv.astype(jnp.bfloat16), w,
                    preferred_element_type=jnp.float32) + b
        return jnp.maximum(y, 0.0) if relu else y

    x = x_ref[...]

    # ---- autoencoder ----
    tra1 = lin(x, 0, True)
    tra2 = lin(tra1, 1, True)
    tra3 = lin(tra2, 2, True)
    z = lin(tra3, 3, False)
    d1 = lin(z, 4, True)
    d2 = lin(d1, 5, True)
    d3 = lin(d2, 6, True)
    x_bar = lin(d3, 7, False)

    # ---- spatial branch: fused node + edge aggregation (one matmul/layer) ----
    agg = agg_ref[...]                               # bf16 [N+E, N] = [A_hat ; edge_mix]

    def spatial(dx):
        y = jnp.dot(agg, dx.astype(jnp.bfloat16),
                    preferred_element_type=jnp.float32)
        return y[:n_nodes], y[n_nodes:]              # sublane-aligned slices

    dx = lin(x, 8, True)                             # proj1 + relu
    h1, ef1 = spatial(dx)
    dx = lin((1.0 - sigma) * h1 + sigma * tra1, 9, True)    # proj2 + relu
    h2, ef2 = spatial(dx)
    dx = lin((1.0 - sigma) * h2 + sigma * tra2, 10, True)   # proj3 + relu
    h3, ef3 = spatial(dx)
    dx = lin((1.0 - sigma) * h3 + sigma * tra3, 11, True)   # proj4 + relu
    h4, ef4 = spatial(dx)
    dx = lin((1.0 - sigma) * h4 + sigma * z, 12, False)     # proj5 (no relu)
    h5, ef5 = spatial(dx)

    # ---- predict = row softmax(h5) (f32, exact normalization) ----
    m = jnp.max(h5, axis=1, keepdims=True)
    e = jnp.exp(h5 - m)
    predict = e / jnp.sum(e, axis=1, keepdims=True)

    # ---- Student-t cluster assignment q (f32, exact normalization) ----
    mu_t = mu_t_ref[...]                             # [n_z, C]
    z2 = jnp.sum(z * z, axis=1, keepdims=True)
    m2 = jnp.sum(mu_t * mu_t, axis=0, keepdims=True)
    dist2 = jnp.maximum(
        z2 + m2 - 2.0 * jnp.dot(z, mu_t, preferred_element_type=jnp.float32), 0.0)
    q = 1.0 / (1.0 + dist2 / v)
    exponent = (v + 1.0) / 2.0
    if exponent != 1.0:          # statically skip pow when v == 1 (default)
        q = q ** exponent
    q = q / jnp.sum(q, axis=1, keepdims=True)

    # ---- edge decoder (kept f32 for accuracy): one fused src/dst gather ----
    zcat = jnp.dot(srcdst_ref[...], z,
                   preferred_element_type=jnp.float32)        # [2E, n_z]
    we = wedge_ref[...]                                        # [2*n_z, edge_dim]
    pred_edge = (jnp.dot(zcat[:n_edges], we[:n_z],
                         preferred_element_type=jnp.float32)
                 + jnp.dot(zcat[n_edges:], we[n_z:],
                           preferred_element_type=jnp.float32)
                 + bslab_ref[len(layers):len(layers) + 1, :edge_dim])

    # ---- packed lane-dense outputs: one unmasked full-width store per slab ----
    node_cols = x_bar.shape[1] + z.shape[1] + q.shape[1] + predict.shape[1]
    node_parts = [x_bar, z, q, predict]
    node_pad = node_out_ref.shape[1] - node_cols
    if node_pad > 0:
        node_parts.append(jnp.zeros((n_nodes, node_pad), jnp.float32))
    node_out_ref[...] = jnp.concatenate(node_parts, axis=1)

    edge_cols = (ef1.shape[1] + ef2.shape[1] + ef3.shape[1] + ef4.shape[1]
                 + ef5.shape[1] + pred_edge.shape[1])
    edge_parts = [ef1, ef2, ef3, ef4, ef5, pred_edge]
    edge_pad = edge_out_ref.shape[1] - edge_cols
    if edge_pad > 0:
        edge_parts.append(jnp.zeros((n_edges, edge_pad), jnp.float32))
    edge_out_ref[...] = jnp.concatenate(edge_parts, axis=1)


# ----------------------------------------------------------------------------
# Wrapper: one pallas_call for the full forward
# ----------------------------------------------------------------------------
def sdcn_forward(params, x, a_hat, edge_mix, src_oh, dst_oh, *, v=1.0, sigma=0.5):
    N, n_input = x.shape
    E = edge_mix.shape[0]
    n_z, n_clusters = params["cluster_mu_t"].shape
    edge_dim = params["edge_w"].shape[1]

    # ---- pack 13 weights into ONE bf16 slab, 13 biases (+edge bias) into ONE f32 slab
    layers = []
    w_blocks = []
    b_rows = []
    off = 0
    for name in _LAYER_ORDER:
        w, b = params[name]
        din, dout = w.shape
        layers.append((off, din, dout))
        pad_rows = (-din) % 16                      # keep bf16 sublane-tile alignment
        w_blocks.append(
            jnp.pad(w, ((0, pad_rows), (0, _LANE - dout))).astype(jnp.bfloat16))
        b_rows.append(jnp.pad(b, (0, _LANE - dout)))
        off += din + pad_rows
    w_slab = jnp.concatenate(w_blocks, axis=0)      # [~448, 128] bf16
    b_rows.append(jnp.pad(params["edge_b"], (0, _LANE - edge_dim)))
    pad_b = (-len(b_rows)) % 8
    b_slab = jnp.stack(
        b_rows + [jnp.zeros((_LANE,), jnp.float32)] * pad_b)   # [16, 128] f32

    # ---- fused aggregation operand (node rows + edge rows), pre-cast bf16
    agg = jnp.concatenate([a_hat, edge_mix], axis=0).astype(jnp.bfloat16)  # [N+E, N]
    # ---- edge-decoder gather operand, f32 for accuracy
    srcdst = jnp.concatenate([src_oh, dst_oh], axis=0)                      # [2E, N]

    mu_t = params["cluster_mu_t"]                   # [n_z, C]
    w_edge = params["edge_w"]                       # [2*n_z, edge_dim]

    e1 = params["enc_1"][0].shape[1]
    e2 = params["enc_2"][0].shape[1]
    e3 = params["enc_3"][0].shape[1]
    x_out = params["x_bar"][0].shape[1]

    node_cols = x_out + n_z + 2 * n_clusters
    node_w = _round_up(node_cols, _LANE)
    edge_cols = e1 + e2 + e3 + n_z + n_clusters + edge_dim
    edge_wid = _round_up(edge_cols, _LANE)

    inputs = [x, agg, srcdst, w_slab, b_slab, w_edge, mu_t]
    in_specs = [_full_spec(tuple(a.shape)) for a in inputs]

    out_shapes = (
        jax.ShapeDtypeStruct((N, node_w), jnp.float32),   # packed node slab
        jax.ShapeDtypeStruct((E, edge_wid), jnp.float32), # packed edge slab
    )
    out_specs = tuple(_full_spec(s.shape) for s in out_shapes)

    kernel = functools.partial(
        _fused_sdcn_kernel, sigma=float(sigma), v=float(v),
        layers=tuple(layers), n_nodes=N, n_edges=E, n_z=n_z, edge_dim=edge_dim)

    node_slab, edge_slab = pl.pallas_call(
        kernel,
        out_shape=out_shapes,
        grid=(1,),
        in_specs=in_specs,
        out_specs=out_specs,
        compiler_params=pltpu.CompilerParams(
            dimension_semantics=("arbitrary",),
            # raise the scoped VMEM limit (v5e default is only 16 MiB); keep
            # well under v7x's 64 MiB physical ceiling.
            vmem_limit_bytes=32 * 1024 * 1024),
    )(*inputs)

    # ---- split packed slabs back into the module's outputs ----
    o = 0
    x_bar = node_slab[:, o:o + x_out]; o += x_out
    z = node_slab[:, o:o + n_z]; o += n_z
    q = node_slab[:, o:o + n_clusters]; o += n_clusters
    predict = node_slab[:, o:o + n_clusters]

    o = 0
    ef1 = edge_slab[:, o:o + e1]; o += e1
    ef2 = edge_slab[:, o:o + e2]; o += e2
    ef3 = edge_slab[:, o:o + e3]; o += e3
    ef4 = edge_slab[:, o:o + n_z]; o += n_z
    ef5 = edge_slab[:, o:o + n_clusters]; o += n_clusters
    pred_edge_feat = edge_slab[:, o:o + edge_dim]

    edge_features = {
        "edge_feat1": ef1, "edge_feat2": ef2, "edge_feat3": ef3,
        "edge_feat4": ef4, "edge_feat5": ef5,
        "pred_edge_feat": pred_edge_feat,
    }
    return x_bar, q, predict, z, edge_features


# ----------------------------------------------------------------------------
# Deterministic parameter init (PyTorch nn.Linear-style uniform bounds)
# ----------------------------------------------------------------------------
def init_linear(key, in_dim, out_dim):
    kw, kb = jax.random.split(key)
    bound = 1.0 / np.sqrt(in_dim)
    w = jax.random.uniform(kw, (in_dim, out_dim), jnp.float32, -bound, bound)
    b = jax.random.uniform(kb, (out_dim,), jnp.float32, -bound, bound)
    return w, b


if __name__ == "__main__":
    # small, shape-consistent config
    N = 16                      # nodes
    n_input = 16
    n_enc_1, n_enc_2, n_enc_3 = 32, 32, 64
    n_dec_1, n_dec_2, n_dec_3 = 64, 32, 32
    n_z, n_clusters = 8, 4
    edge_dim = n_input          # module default: edge_dim = n_input
    hidden_size = n_enc_1
    v, sigma = 1.0, 0.5

    root = jax.random.PRNGKey(0)
    keys = jax.random.split(root, 20)

    x = jax.random.normal(keys[0], (N, n_input), jnp.float32)

    # deterministic ring graph (both directions) -> static edge count E = 2N
    base = np.arange(N)
    src_np = np.concatenate([base, (base + 1) % N]).astype(np.int32)
    dst_np = np.concatenate([(base + 1) % N, base]).astype(np.int32)
    E = src_np.shape[0]
    edge_index = jnp.stack([jnp.asarray(src_np), jnp.asarray(dst_np)], axis=0)

    adj = np.zeros((N, N), np.float32)
    adj[src_np, dst_np] = 1.0
    a_hat_np = adj + np.eye(N, dtype=np.float32)
    a_hat_np = a_hat_np / a_hat_np.sum(axis=1, keepdims=True)
    a_hat = jnp.asarray(a_hat_np)

    src_oh_np = np.zeros((E, N), np.float32)
    dst_oh_np = np.zeros((E, N), np.float32)
    src_oh_np[np.arange(E), src_np] = 1.0
    dst_oh_np[np.arange(E), dst_np] = 1.0
    src_oh = jnp.asarray(src_oh_np)
    dst_oh = jnp.asarray(dst_oh_np)
    # host-side precomputation: edge aggregation 0.5*(dx[src]+dx[dst]) as one matmul
    edge_mix = jnp.asarray(0.5 * (src_oh_np + dst_oh_np))

    # original ("onehot") edge features: onehot(|src-dst| % hidden_size)
    dist_idx = np.abs(src_np - dst_np) % hidden_size
    orig_edge_feat = jax.nn.one_hot(jnp.asarray(dist_idx), hidden_size, dtype=jnp.float32)

    params = {
        "enc_1": init_linear(keys[1], n_input, n_enc_1),
        "enc_2": init_linear(keys[2], n_enc_1, n_enc_2),
        "enc_3": init_linear(keys[3], n_enc_2, n_enc_3),
        "z_layer": init_linear(keys[4], n_enc_3, n_z),
        "dec_1": init_linear(keys[5], n_z, n_dec_1),
        "dec_2": init_linear(keys[6], n_dec_1, n_dec_2),
        "dec_3": init_linear(keys[7], n_dec_2, n_dec_3),
        "x_bar": init_linear(keys[8], n_dec_3, n_input),
        "proj1": init_linear(keys[9], n_input, n_enc_1),
        "proj2": init_linear(keys[10], n_enc_1, n_enc_2),
        "proj3": init_linear(keys[11], n_enc_2, n_enc_3),
        "proj4": init_linear(keys[12], n_enc_3, n_z),
        "proj5": init_linear(keys[13], n_z, n_clusters),
    }
    # cluster centers: xavier-normal (n_clusters, n_z), stored transposed [n_z, C]
    xavier_std = np.sqrt(2.0 / (n_clusters + n_z))
    mu = jax.random.normal(keys[14], (n_clusters, n_z), jnp.float32) * xavier_std
    params["cluster_mu_t"] = mu.T
    # edge decoder: Linear(2*n_z, edge_dim)
    w_edge, b_edge = init_linear(keys[15], 2 * n_z, edge_dim)
    params["edge_w"] = w_edge
    params["edge_b"] = b_edge

    fwd = jax.jit(functools.partial(sdcn_forward, v=v, sigma=sigma))
    x_bar, q, predict, z, edge_features = fwd(params, x, a_hat, edge_mix, src_oh, dst_oh)
    edge_features["orig_edge_feat"] = orig_edge_feat

    spatial_shapes = {
        "Layer 1": (N, n_enc_1), "Layer 2": (N, n_enc_2), "Layer 3": (N, n_enc_3),
        "Layer 4": (N, n_z), "Layer 5": (N, n_clusters),
    }
    outputs = (x_bar, q, predict, z, spatial_shapes, edge_features, edge_index)
    jax.block_until_ready((x_bar, q, predict, z, edge_features, edge_index))

    assert x_bar.shape == (N, n_input)
    assert q.shape == (N, n_clusters)
    assert predict.shape == (N, n_clusters)
    assert z.shape == (N, n_z)
    assert edge_features["edge_feat1"].shape == (E, n_enc_1)
    assert edge_features["edge_feat3"].shape == (E, n_enc_3)
    assert edge_features["edge_feat5"].shape == (E, n_clusters)
    assert edge_features["pred_edge_feat"].shape == (E, edge_dim)
    assert bool(jnp.all(jnp.isfinite(q))) and bool(jnp.all(jnp.isfinite(predict)))
    assert bool(jnp.allclose(jnp.sum(q, axis=1), 1.0, atol=1e-5))
    assert bool(jnp.allclose(jnp.sum(predict, axis=1), 1.0, atol=1e-5))
    print("KERNEL_OK")
</pallas_src>

<mosaic_0001>
module attributes {stable_mosaic.version = 11 : i64} {
  func.func @_fused_sdcn_kernel(%arg0: i32, %arg1: memref<16x16xf32, #tpu.memory_space<vmem>>, %arg2: memref<48x16xbf16, #tpu.memory_space<vmem>>, %arg3: memref<64x16xf32, #tpu.memory_space<vmem>>, %arg4: memref<448x128xbf16, #tpu.memory_space<vmem>>, %arg5: memref<16x128xf32, #tpu.memory_space<vmem>>, %arg6: memref<16x16xf32, #tpu.memory_space<vmem>>, %arg7: memref<8x4xf32, #tpu.memory_space<vmem>>, %arg8: memref<16x128xf32, #tpu.memory_space<vmem>>, %arg9: memref<32x256xf32, #tpu.memory_space<vmem>>) attributes {dimension_semantics = [#tpu.dimension_semantics<arbitrary>], iteration_bounds = array<i64: 1>, scalar_prefetch = 0 : i64, scratch_operands = 0 : i64, tpu.core_type = #tpu.core_type<tc>, window_params = [{pipeline_mode = #tpu.pipeline_mode<synchronous>, transform_indices = @transform_0, window_bounds = array<i64: 16, 16>}, {pipeline_mode = #tpu.pipeline_mode<synchronous>, transform_indices = @transform_1, window_bounds = array<i64: 48, 16>}, {pipeline_mode = #tpu.pipeline_mode<synchronous>, transform_indices = @transform_2, window_bounds = array<i64: 64, 16>}, {pipeline_mode = #tpu.pipeline_mode<synchronous>, transform_indices = @transform_3, window_bounds = array<i64: 448, 128>}, {pipeline_mode = #tpu.pipeline_mode<synchronous>, transform_indices = @transform_4, window_bounds = array<i64: 16, 128>}, {pipeline_mode = #tpu.pipeline_mode<synchronous>, transform_indices = @transform_5, window_bounds = array<i64: 16, 16>}, {pipeline_mode = #tpu.pipeline_mode<synchronous>, transform_indices = @transform_6, window_bounds = array<i64: 8, 4>}, {pipeline_mode = #tpu.pipeline_mode<synchronous>, transform_indices = @transform_7, window_bounds = array<i64: 16, 128>}, {pipeline_mode = #tpu.pipeline_mode<synchronous>, transform_indices = @transform_8, window_bounds = array<i64: 32, 256>}]} {
    %c0 = arith.constant 0 : index
    %c0_0 = arith.constant 0 : index
    %0 = vector.load %arg1[%c0, %c0_0] : memref<16x16xf32, #tpu.memory_space<vmem>>, vector<16x16xf32>
    %c0_1 = arith.constant 0 : index
    %c0_2 = arith.constant 0 : index
    %1 = vector.load %arg4[%c0_1, %c0_2] : memref<448x128xbf16, #tpu.memory_space<vmem>>, vector<16x32xbf16>
    %c0_3 = arith.constant 0 : index
    %c0_4 = arith.constant 0 : index
    %2 = vector.load %arg5[%c0_3, %c0_4] : memref<16x128xf32, #tpu.memory_space<vmem>>, vector<1x32xf32>
    %3 = arith.truncf %0 : vector<16x16xf32> to vector<16x16xbf16>
    %cst = arith.constant dense<0.000000e+00> : vector<16x32xf32>
    %4 = tpu.matmul %3, %1, %cst {dimension_numbers = #tpu.dot_dimension_numbers<[1], [0], [0], [1], [0, 0, 1, 1], [], []>} : vector<16x16xbf16>, vector<16x32xbf16>, vector<16x32xf32> -> vector<16x32xf32>
    %5 = vector.broadcast %2 : vector<1x32xf32> to vector<16x32xf32>
    %6 = arith.addf %4, %5 : vector<16x32xf32>
    %cst_5 = arith.constant 0.000000e+00 : f32
    %7 = vector.broadcast %cst_5 : f32 to vector<16x32xf32>
    %8 = arith.maximumf %6, %7 : vector<16x32xf32>
    %c16 = arith.constant 16 : index
    %c0_6 = arith.constant 0 : index
    %9 = vector.load %arg4[%c16, %c0_6] : memref<448x128xbf16, #tpu.memory_space<vmem>>, vector<32x32xbf16>
    %c1 = arith.constant 1 : index
    %c0_7 = arith.constant 0 : index
    %10 = vector.load %arg5[%c1, %c0_7] : memref<16x128xf32, #tpu.memory_space<vmem>>, vector<1x32xf32>
    %11 = arith.truncf %8 : vector<16x32xf32> to vector<16x32xbf16>
    %cst_8 = arith.constant dense<0.000000e+00> : vector<16x32xf32>
    %12 = tpu.matmul %11, %9, %cst_8 {dimension_numbers = #tpu.dot_dimension_numbers<[1], [0], [0], [1], [0, 0, 1, 1], [], []>} : vector<16x32xbf16>, vector<32x32xbf16>, vector<16x32xf32> -> vector<16x32xf32>
    %13 = vector.broadcast %10 : vector<1x32xf32> to vector<16x32xf32>
    %14 = arith.addf %12, %13 : vector<16x32xf32>
    %cst_9 = arith.constant 0.000000e+00 : f32
    %15 = vector.broadcast %cst_9 : f32 to vector<16x32xf32>
    %16 = arith.maximumf %14, %15 : vector<16x32xf32>
    %c48 = arith.constant 48 : index
    %c0_10 = arith.constant 0 : index
    %17 = vector.load %arg4[%c48, %c0_10] : memref<448x128xbf16, #tpu.memory_space<vmem>>, vector<32x64xbf16>
    %c2 = arith.constant 2 : index
    %c0_11 = arith.constant 0 : index
    %18 = vector.load %arg5[%c2, %c0_11] : memref<16x128xf32, #tpu.memory_space<vmem>>, vector<1x64xf32>
    %19 = arith.truncf %16 : vector<16x32xf32> to vector<16x32xbf16>
    %cst_12 = arith.constant dense<0.000000e+00> : vector<16x64xf32>
    %20 = tpu.matmul %19, %17, %cst_12 {dimension_numbers = #tpu.dot_dimension_numbers<[1], [0], [0], [1], [0, 0, 1, 1], [], []>} : vector<16x32xbf16>, vector<32x64xbf16>, vector<16x64xf32> -> vector<16x64xf32>
    %21 = vector.broadcast %18 : vector<1x64xf32> to vector<16x64xf32>
    %22 = arith.addf %20, %21 : vector<16x64xf32>
    %cst_13 = arith.constant 0.000000e+00 : f32
    %23 = vector.broadcast %cst_13 : f32 to vector<16x64xf32>
    %24 = arith.maximumf %22, %23 : vector<16x64xf32>
    %c80 = arith.constant 80 : index
    %c0_14 = arith.constant 0 : index
    %25 = vector.load %arg4[%c80, %c0_14] : memref<448x128xbf16, #tpu.memory_space<vmem>>, vector<64x8xbf16>
    %c3 = arith.constant 3 : index
    %c0_15 = arith.constant 0 : index
    %26 = vector.load %arg5[%c3, %c0_15] : memref<16x128xf32, #tpu.memory_space<vmem>>, vector<1x8xf32>
    %27 = arith.truncf %24 : vector<16x64xf32> to vector<16x64xbf16>
    %cst_16 = arith.constant dense<0.000000e+00> : vector<16x8xf32>
    %28 = tpu.matmul %27, %25, %cst_16 {dimension_numbers = #tpu.dot_dimension_numbers<[1], [0], [0], [1], [0, 0, 1, 1], [], []>} : vector<16x64xbf16>, vector<64x8xbf16>, vector<16x8xf32> -> vector<16x8xf32>
    %29 = vector.broadcast %26 : vector<1x8xf32> to vector<16x8xf32>
    %30 = arith.addf %28, %29 : vector<16x8xf32>
    %c144 = arith.constant 144 : index
    %c0_17 = arith.constant 0 : index
    %31 = vector.load %arg4[%c144, %c0_17] : memref<448x128xbf16, #tpu.memory_space<vmem>>, vector<8x64xbf16>
    %c4 = arith.constant 4 : index
    %c0_18 = arith.constant 0 : index
    %32 = vector.load %arg5[%c4, %c0_18] : memref<16x128xf32, #tpu.memory_space<vmem>>, vector<1x64xf32>
    %33 = arith.truncf %30 : vector<16x8xf32> to vector<16x8xbf16>
    %cst_19 = arith.constant dense<0.000000e+00> : vector<16x64xf32>
    %34 = tpu.matmul %33, %31, %cst_19 {dimension_numbers = #tpu.dot_dimension_numbers<[1], [0], [0], [1], [0, 0, 1, 1], [], []>} : vector<16x8xbf16>, vector<8x64xbf16>, vector<16x64xf32> -> vector<16x64xf32>
    %35 = vector.broadcast %32 : vector<1x64xf32> to vector<16x64xf32>
    %36 = arith.addf %34, %35 : vector<16x64xf32>
    %cst_20 = arith.constant 0.000000e+00 : f32
    %37 = vector.broadcast %cst_20 : f32 to vector<16x64xf32>
    %38 = arith.maximumf %36, %37 : vector<16x64xf32>
    %c160 = arith.constant 160 : index
    %c0_21 = arith.constant 0 : index
    %39 = vector.load %arg4[%c160, %c0_21] : memref<448x128xbf16, #tpu.memory_space<vmem>>, vector<64x32xbf16>
    %c5 = arith.constant 5 : index
    %c0_22 = arith.constant 0 : index
    %40 = vector.load %arg5[%c5, %c0_22] : memref<16x128xf32, #tpu.memory_space<vmem>>, vector<1x32xf32>
    %41 = arith.truncf %38 : vector<16x64xf32> to vector<16x64xbf16>
    %cst_23 = arith.constant dense<0.000000e+00> : vector<16x32xf32>
    %42 = tpu.matmul %41, %39, %cst_23 {dimension_numbers = #tpu.dot_dimension_numbers<[1], [0], [0], [1], [0, 0, 1, 1], [], []>} : vector<16x64xbf16>, vector<64x32xbf16>, vector<16x32xf32> -> vector<16x32xf32>
    %43 = vector.broadcast %40 : vector<1x32xf32> to vector<16x32xf32>
    %44 = arith.addf %42, %43 : vector<16x32xf32>
    %cst_24 = arith.constant 0.000000e+00 : f32
    %45 = vector.broadcast %cst_24 : f32 to vector<16x32xf32>
    %46 = arith.maximumf %44, %45 : vector<16x32xf32>
    %c224 = arith.constant 224 : index
    %c0_25 = arith.constant 0 : index
    %47 = vector.load %arg4[%c224, %c0_25] : memref<448x128xbf16, #tpu.memory_space<vmem>>, vector<32x32xbf16>
    %c6 = arith.constant 6 : index
    %c0_26 = arith.constant 0 : index
    %48 = vector.load %arg5[%c6, %c0_26] : memref<16x128xf32, #tpu.memory_space<vmem>>, vector<1x32xf32>
    %49 = arith.truncf %46 : vector<16x32xf32> to vector<16x32xbf16>
    %cst_27 = arith.constant dense<0.000000e+00> : vector<16x32xf32>
    %50 = tpu.matmul %49, %47, %cst_27 {dimension_numbers = #tpu.dot_dimension_numbers<[1], [0], [0], [1], [0, 0, 1, 1], [], []>} : vector<16x32xbf16>, vector<32x32xbf16>, vector<16x32xf32> -> vector<16x32xf32>
    %51 = vector.broadcast %48 : vector<1x32xf32> to vector<16x32xf32>
    %52 = arith.addf %50, %51 : vector<16x32xf32>
    %cst_28 = arith.constant 0.000000e+00 : f32
    %53 = vector.broadcast %cst_28 : f32 to vector<16x32xf32>
    %54 = arith.maximumf %52, %53 : vector<16x32xf32>
    %c256 = arith.constant 256 : index
    %c0_29 = arith.constant 0 : index
    %55 = vector.load %arg4[%c256, %c0_29] : memref<448x128xbf16, #tpu.memory_space<vmem>>, vector<32x16xbf16>
    %c7 = arith.constant 7 : index
    %c0_30 = arith.constant 0 : index
    %56 = vector.load %arg5[%c7, %c0_30] : memref<16x128xf32, #tpu.memory_space<vmem>>, vector<1x16xf32>
    %57 = arith.truncf %54 : vector<16x32xf32> to vector<16x32xbf16>
    %cst_31 = arith.constant dense<0.000000e+00> : vector<16x16xf32>
    %58 = tpu.matmul %57, %55, %cst_31 {dimension_numbers = #tpu.dot_dimension_numbers<[1], [0], [0], [1], [0, 0, 1, 1], [], []>} : vector<16x32xbf16>, vector<32x16xbf16>, vector<16x16xf32> -> vector<16x16xf32>
    %59 = vector.broadcast %56 : vector<1x16xf32> to vector<16x16xf32>
    %60 = arith.addf %58, %59 : vector<16x16xf32>
    %c0_32 = arith.constant 0 : index
    %c0_33 = arith.constant 0 : index
    %61 = vector.load %arg2[%c0_32, %c0_33] : memref<48x16xbf16, #tpu.memory_space<vmem>>, vector<48x16xbf16>
    %c288 = arith.constant 288 : index
    %c0_34 = arith.constant 0 : index
    %62 = vector.load %arg4[%c288, %c0_34] : memref<448x128xbf16, #tpu.memory_space<vmem>>, vector<16x32xbf16>
    %c8 = arith.constant 8 : index
    %c0_35 = arith.constant 0 : index
    %63 = vector.load %arg5[%c8, %c0_35] : memref<16x128xf32, #tpu.memory_space<vmem>>, vector<1x32xf32>
    %64 = arith.truncf %0 : vector<16x16xf32> to vector<16x16xbf16>
    %cst_36 = arith.constant dense<0.000000e+00> : vector<16x32xf32>
    %65 = tpu.matmul %64, %62, %cst_36 {dimension_numbers = #tpu.dot_dimension_numbers<[1], [0], [0], [1], [0, 0, 1, 1], [], []>} : vector<16x16xbf16>, vector<16x32xbf16>, vector<16x32xf32> -> vector<16x32xf32>
    %66 = vector.broadcast %63 : vector<1x32xf32> to vector<16x32xf32>
    %67 = arith.addf %65, %66 : vector<16x32xf32>
    %cst_37 = arith.constant 0.000000e+00 : f32
    %68 = vector.broadcast %cst_37 : f32 to vector<16x32xf32>
    %69 = arith.maximumf %67, %68 : vector<16x32xf32>
    %70 = arith.truncf %69 : vector<16x32xf32> to vector<16x32xbf16>
    %cst_38 = arith.constant dense<0.000000e+00> : vector<48x32xf32>
    %71 = tpu.matmul %61, %70, %cst_38 {dimension_numbers = #tpu.dot_dimension_numbers<[1], [0], [0], [1], [0, 0, 1, 1], [], []>} : vector<48x16xbf16>, vector<16x32xbf16>, vector<48x32xf32> -> vector<48x32xf32>
    %72 = vector.extract_strided_slice %71 {offsets = [0, 0], sizes = [16, 32], strides = [1, 1]} : vector<48x32xf32> to vector<16x32xf32>
    %73 = vector.extract_strided_slice %71 {offsets = [16, 0], sizes = [32, 32], strides = [1, 1]} : vector<48x32xf32> to vector<32x32xf32>
    %cst_39 = arith.constant 5.000000e-01 : f32
    %74 = vector.broadcast %cst_39 : f32 to vector<16x32xf32>
    %75 = arith.mulf %74, %72 : vector<16x32xf32>
    %cst_40 = arith.constant 5.000000e-01 : f32
    %76 = vector.broadcast %cst_40 : f32 to vector<16x32xf32>
    %77 = arith.mulf %76, %8 : vector<16x32xf32>
    %78 = arith.addf %75, %77 : vector<16x32xf32>
    %c304 = arith.constant 304 : index
    %c0_41 = arith.constant 0 : index
    %79 = vector.load %arg4[%c304, %c0_41] : memref<448x128xbf16, #tpu.memory_space<vmem>>, vector<32x32xbf16>
    %c9 = arith.constant 9 : index
    %c0_42 = arith.constant 0 : index
    %80 = vector.load %arg5[%c9, %c0_42] : memref<16x128xf32, #tpu.memory_space<vmem>>, vector<1x32xf32>
    %81 = arith.truncf %78 : vector<16x32xf32> to vector<16x32xbf16>
    %cst_43 = arith.constant dense<0.000000e+00> : vector<16x32xf32>
    %82 = tpu.matmul %81, %79, %cst_43 {dimension_numbers = #tpu.dot_dimension_numbers<[1], [0], [0], [1], [0, 0, 1, 1], [], []>} : vector<16x32xbf16>, vector<32x32xbf16>, vector<16x32xf32> -> vector<16x32xf32>
    %83 = vector.broadcast %80 : vector<1x32xf32> to vector<16x32xf32>
    %84 = arith.addf %82, %83 : vector<16x32xf32>
    %cst_44 = arith.constant 0.000000e+00 : f32
    %85 = vector.broadcast %cst_44 : f32 to vector<16x32xf32>
    %86 = arith.maximumf %84, %85 : vector<16x32xf32>
    %87 = arith.truncf %86 : vector<16x32xf32> to vector<16x32xbf16>
    %cst_45 = arith.constant dense<0.000000e+00> : vector<48x32xf32>
    %88 = tpu.matmul %61, %87, %cst_45 {dimension_numbers = #tpu.dot_dimension_numbers<[1], [0], [0], [1], [0, 0, 1, 1], [], []>} : vector<48x16xbf16>, vector<16x32xbf16>, vector<48x32xf32> -> vector<48x32xf32>
    %89 = vector.extract_strided_slice %88 {offsets = [0, 0], sizes = [16, 32], strides = [1, 1]} : vector<48x32xf32> to vector<16x32xf32>
    %90 = vector.extract_strided_slice %88 {offsets = [16, 0], sizes = [32, 32], strides = [1, 1]} : vector<48x32xf32> to vector<32x32xf32>
    %cst_46 = arith.constant 5.000000e-01 : f32
    %91 = vector.broadcast %cst_46 : f32 to vector<16x32xf32>
    %92 = arith.mulf %91, %89 : vector<16x32xf32>
    %cst_47 = arith.constant 5.000000e-01 : f32
    %93 = vector.broadcast %cst_47 : f32 to vector<16x32xf32>
    %94 = arith.mulf %93, %16 : vector<16x32xf32>
    %95 = arith.addf %92, %94 : vector<16x32xf32>
    %c336 = arith.constant 336 : index
    %c0_48 = arith.constant 0 : index
    %96 = vector.load %arg4[%c336, %c0_48] : memref<448x128xbf16, #tpu.memory_space<vmem>>, vector<32x64xbf16>
    %c10 = arith.constant 10 : index
    %c0_49 = arith.constant 0 : index
    %97 = vector.load %arg5[%c10, %c0_49] : memref<16x128xf32, #tpu.memory_space<vmem>>, vector<1x64xf32>
    %98 = arith.truncf %95 : vector<16x32xf32> to vector<16x32xbf16>
    %cst_50 = arith.constant dense<0.000000e+00> : vector<16x64xf32>
    %99 = tpu.matmul %98, %96, %cst_50 {dimension_numbers = #tpu.dot_dimension_numbers<[1], [0], [0], [1], [0, 0, 1, 1], [], []>} : vector<16x32xbf16>, vector<32x64xbf16>, vector<16x64xf32> -> vector<16x64xf32>
    %100 = vector.broadcast %97 : vector<1x64xf32> to vector<16x64xf32>
    %101 = arith.addf %99, %100 : vector<16x64xf32>
    %cst_51 = arith.constant 0.000000e+00 : f32
    %102 = vector.broadcast %cst_51 : f32 to vector<16x64xf32>
    %103 = arith.maximumf %101, %102 : vector<16x64xf32>
    %104 = arith.truncf %103 : vector<16x64xf32> to vector<16x64xbf16>
    %cst_52 = arith.constant dense<0.000000e+00> : vector<48x64xf32>
    %105 = tpu.matmul %61, %104, %cst_52 {dimension_numbers = #tpu.dot_dimension_numbers<[1], [0], [0], [1], [0, 0, 1, 1], [], []>} : vector<48x16xbf16>, vector<16x64xbf16>, vector<48x64xf32> -> vector<48x64xf32>
    %106 = vector.extract_strided_slice %105 {offsets = [0, 0], sizes = [16, 64], strides = [1, 1]} : vector<48x64xf32> to vector<16x64xf32>
    %107 = vector.extract_strided_slice %105 {offsets = [16, 0], sizes = [32, 64], strides = [1, 1]} : vector<48x64xf32> to vector<32x64xf32>
    %cst_53 = arith.constant 5.000000e-01 : f32
    %108 = vector.broadcast %cst_53 : f32 to vector<16x64xf32>
    %109 = arith.mulf %108, %106 : vector<16x64xf32>
    %cst_54 = arith.constant 5.000000e-01 : f32
    %110 = vector.broadcast %cst_54 : f32 to vector<16x64xf32>
    %111 = arith.mulf %110, %24 : vector<16x64xf32>
    %112 = arith.addf %109, %111 : vector<16x64xf32>
    %c368 = arith.constant 368 : index
    %c0_55 = arith.constant 0 : index
    %113 = vector.load %arg4[%c368, %c0_55] : memref<448x128xbf16, #tpu.memory_space<vmem>>, vector<64x8xbf16>
    %c11 = arith.constant 11 : index
    %c0_56 = arith.constant 0 : index
    %114 = vector.load %arg5[%c11, %c0_56] : memref<16x128xf32, #tpu.memory_space<vmem>>, vector<1x8xf32>
    %115 = arith.truncf %112 : vector<16x64xf32> to vector<16x64xbf16>
    %cst_57 = arith.constant dense<0.000000e+00> : vector<16x8xf32>
    %116 = tpu.matmul %115, %113, %cst_57 {dimension_numbers = #tpu.dot_dimension_numbers<[1], [0], [0], [1], [0, 0, 1, 1], [], []>} : vector<16x64xbf16>, vector<64x8xbf16>, vector<16x8xf32> -> vector<16x8xf32>
    %117 = vector.broadcast %114 : vector<1x8xf32> to vector<16x8xf32>
    %118 = arith.addf %116, %117 : vector<16x8xf32>
    %cst_58 = arith.constant 0.000000e+00 : f32
    %119 = vector.broadcast %cst_58 : f32 to vector<16x8xf32>
    %120 = arith.maximumf %118, %119 : vector<16x8xf32>
    %121 = arith.truncf %120 : vector<16x8xf32> to vector<16x8xbf16>
    %cst_59 = arith.constant dense<0.000000e+00> : vector<48x8xf32>
    %122 = tpu.matmul %61, %121, %cst_59 {dimension_numbers = #tpu.dot_dimension_numbers<[1], [0], [0], [1], [0, 0, 1, 1], [], []>} : vector<48x16xbf16>, vector<16x8xbf16>, vector<48x8xf32> -> vector<48x8xf32>
    %123 = vector.extract_strided_slice %122 {offsets = [0, 0], sizes = [16, 8], strides = [1, 1]} : vector<48x8xf32> to vector<16x8xf32>
    %124 = vector.extract_strided_slice %122 {offsets = [16, 0], sizes = [32, 8], strides = [1, 1]} : vector<48x8xf32> to vector<32x8xf32>
    %cst_60 = arith.constant 5.000000e-01 : f32
    %125 = vector.broadcast %cst_60 : f32 to vector<16x8xf32>
    %126 = arith.mulf %125, %123 : vector<16x8xf32>
    %cst_61 = arith.constant 5.000000e-01 : f32
    %127 = vector.broadcast %cst_61 : f32 to vector<16x8xf32>
    %128 = arith.mulf %127, %30 : vector<16x8xf32>
    %129 = arith.addf %126, %128 : vector<16x8xf32>
    %c432 = arith.constant 432 : index
    %c0_62 = arith.constant 0 : index
    %130 = vector.load %arg4[%c432, %c0_62] : memref<448x128xbf16, #tpu.memory_space<vmem>>, vector<8x4xbf16>
    %c12 = arith.constant 12 : index
    %c0_63 = arith.constant 0 : index
    %131 = vector.load %arg5[%c12, %c0_63] : memref<16x128xf32, #tpu.memory_space<vmem>>, vector<1x4xf32>
    %132 = arith.truncf %129 : vector<16x8xf32> to vector<16x8xbf16>
    %cst_64 = arith.constant dense<0.000000e+00> : vector<16x4xf32>
    %133 = tpu.matmul %132, %130, %cst_64 {dimension_numbers = #tpu.dot_dimension_numbers<[1], [0], [0], [1], [0, 0, 1, 1], [], []>} : vector<16x8xbf16>, vector<8x4xbf16>, vector<16x4xf32> -> vector<16x4xf32>
    %134 = vector.broadcast %131 : vector<1x4xf32> to vector<16x4xf32>
    %135 = arith.addf %133, %134 : vector<16x4xf32>
    %136 = arith.truncf %135 : vector<16x4xf32> to vector<16x4xbf16>
    %cst_65 = arith.constant dense<0.000000e+00> : vector<48x4xf32>
    %137 = tpu.matmul %61, %136, %cst_65 {dimension_numbers = #tpu.dot_dimension_numbers<[1], [0], [0], [1], [0, 0, 1, 1], [], []>} : vector<48x16xbf16>, vector<16x4xbf16>, vector<48x4xf32> -> vector<48x4xf32>
    %138 = vector.extract_strided_slice %137 {offsets = [0, 0], sizes = [16, 4], strides = [1, 1]} : vector<48x4xf32> to vector<16x4xf32>
    %139 = vector.extract_strided_slice %137 {offsets = [16, 0], sizes = [32, 4], strides = [1, 1]} : vector<48x4xf32> to vector<32x4xf32>
    %cst_66 = arith.constant dense<0xFF800000> : vector<16xf32>
    %140 = vector.multi_reduction <maximumf>, %138, %cst_66 [1] : vector<16x4xf32> to vector<16xf32>
    %141 = vector.shape_cast %140 : vector<16xf32> to vector<16x1xf32>
    %142 = vector.broadcast %141 : vector<16x1xf32> to vector<16x4xf32>
    %143 = arith.subf %138, %142 : vector<16x4xf32>
    %144 = math.exp %143 : vector<16x4xf32>
    %cst_67 = arith.constant dense<0.000000e+00> : vector<16xf32>
    %145 = vector.multi_reduction <add>, %144, %cst_67 [1] : vector<16x4xf32> to vector<16xf32>
    %146 = vector.shape_cast %145 : vector<16xf32> to vector<16x1xf32>
    %147 = vector.broadcast %146 : vector<16x1xf32> to vector<16x4xf32>
    %148 = arith.divf %144, %147 : vector<16x4xf32>
    %c0_68 = arith.constant 0 : index
    %c0_69 = arith.constant 0 : index
    %149 = vector.load %arg7[%c0_68, %c0_69] : memref<8x4xf32, #tpu.memory_space<vmem>>, vector<8x4xf32>
    %150 = arith.mulf %30, %30 : vector<16x8xf32>
    %cst_70 = arith.constant dense<0.000000e+00> : vector<16xf32>
    %151 = vector.multi_reduction <add>, %150, %cst_70 [1] : vector<16x8xf32> to vector<16xf32>
    %152 = vector.shape_cast %151 : vector<16xf32> to vector<16x1xf32>
    %153 = arith.mulf %149, %149 : vector<8x4xf32>
    %cst_71 = arith.constant dense<0.000000e+00> : vector<4xf32>
    %154 = vector.multi_reduction <add>, %153, %cst_71 [0] : vector<8x4xf32> to vector<4xf32>
    %155 = vector.shape_cast %154 : vector<4xf32> to vector<1x4xf32>
    %156 = vector.broadcast %152 : vector<16x1xf32> to vector<16x4xf32>
    %157 = vector.broadcast %155 : vector<1x4xf32> to vector<16x4xf32>
    %158 = arith.addf %156, %157 : vector<16x4xf32>
    %cst_72 = arith.constant dense<0.000000e+00> : vector<16x4xf32>
    %159 = tpu.matmul %30, %149, %cst_72 {dimension_numbers = #tpu.dot_dimension_numbers<[1], [0], [0], [1], [0, 0, 1, 1], [], []>} : vector<16x8xf32>, vector<8x4xf32>, vector<16x4xf32> -> vector<16x4xf32>
    %cst_73 = arith.constant 2.000000e+00 : f32
    %160 = vector.broadcast %cst_73 : f32 to vector<16x4xf32>
    %161 = arith.mulf %160, %159 : vector<16x4xf32>
    %162 = arith.subf %158, %161 : vector<16x4xf32>
    %cst_74 = arith.constant 0.000000e+00 : f32
    %163 = vector.broadcast %cst_74 : f32 to vector<16x4xf32>
    %164 = arith.maximumf %162, %163 : vector<16x4xf32>
    %cst_75 = arith.constant 1.000000e+00 : f32
    %165 = vector.broadcast %cst_75 : f32 to vector<16x4xf32>
    %166 = arith.divf %164, %165 : vector<16x4xf32>
    %cst_76 = arith.constant 1.000000e+00 : f32
    %167 = vector.broadcast %cst_76 : f32 to vector<16x4xf32>
    %168 = arith.addf %167, %166 : vector<16x4xf32>
    %cst_77 = arith.constant 1.000000e+00 : f32
    %169 = vector.broadcast %cst_77 : f32 to vector<16x4xf32>
    %170 = arith.divf %169, %168 : vector<16x4xf32>
    %cst_78 = arith.constant dense<0.000000e+00> : vector<16xf32>
    %171 = vector.multi_reduction <add>, %170, %cst_78 [1] : vector<16x4xf32> to vector<16xf32>
    %172 = vector.shape_cast %171 : vector<16xf32> to vector<16x1xf32>
    %173 = vector.broadcast %172 : vector<16x1xf32> to vector<16x4xf32>
    %174 = arith.divf %170, %173 : vector<16x4xf32>
    %c0_79 = arith.constant 0 : index
    %c0_80 = arith.constant 0 : index
    %175 = vector.load %arg3[%c0_79, %c0_80] : memref<64x16xf32, #tpu.memory_space<vmem>>, vector<64x16xf32>
    %cst_81 = arith.constant dense<0.000000e+00> : vector<64x8xf32>
    %176 = tpu.matmul %175, %30, %cst_81 {dimension_numbers = #tpu.dot_dimension_numbers<[1], [0], [0], [1], [0, 0, 1, 1], [], []>} : vector<64x16xf32>, vector<16x8xf32>, vector<64x8xf32> -> vector<64x8xf32>
    %c0_82 = arith.constant 0 : index
    %c0_83 = arith.constant 0 : index
    %177 = vector.load %arg6[%c0_82, %c0_83] : memref<16x16xf32, #tpu.memory_space<vmem>>, vector<16x16xf32>
    %178 = vector.extract_strided_slice %176 {offsets = [0, 0], sizes = [32, 8], strides = [1, 1]} : vector<64x8xf32> to vector<32x8xf32>
    %179 = vector.extract_strided_slice %177 {offsets = [0, 0], sizes = [8, 16], strides = [1, 1]} : vector<16x16xf32> to vector<8x16xf32>
    %cst_84 = arith.constant dense<0.000000e+00> : vector<32x16xf32>
    %180 = tpu.matmul %178, %179, %cst_84 {dimension_numbers = #tpu.dot_dimension_numbers<[1], [0], [0], [1], [0, 0, 1, 1], [], []>} : vector<32x8xf32>, vector<8x16xf32>, vector<32x16xf32> -> vector<32x16xf32>
    %181 = vector.extract_strided_slice %176 {offsets = [32, 0], sizes = [32, 8], strides = [1, 1]} : vector<64x8xf32> to vector<32x8xf32>
    %182 = vector.extract_strided_slice %177 {offsets = [8, 0], sizes = [8, 16], strides = [1, 1]} : vector<16x16xf32> to vector<8x16xf32>
    %cst_85 = arith.constant dense<0.000000e+00> : vector<32x16xf32>
    %183 = tpu.matmul %181, %182, %cst_85 {dimension_numbers = #tpu.dot_dimension_numbers<[1], [0], [0], [1], [0, 0, 1, 1], [], []>} : vector<32x8xf32>, vector<8x16xf32>, vector<32x16xf32> -> vector<32x16xf32>
    %184 = arith.addf %180, %183 : vector<32x16xf32>
    %c13 = arith.constant 13 : index
    %c0_86 = arith.constant 0 : index
    %185 = vector.load %arg5[%c13, %c0_86] : memref<16x128xf32, #tpu.memory_space<vmem>>, vector<1x16xf32>
    %186 = vector.broadcast %185 : vector<1x16xf32> to vector<32x16xf32>
    %187 = arith.addf %184, %186 : vector<32x16xf32>
    %cst_87 = arith.constant 0.000000e+00 : f32
    %188 = vector.broadcast %cst_87 : f32 to vector<16x96xf32>
    %189 = tpu.concatenate %60, %30, %174, %148, %188 in 1 : vector<16x16xf32>, vector<16x8xf32>, vector<16x4xf32>, vector<16x4xf32>, vector<16x96xf32> -> vector<16x128xf32>
    %c0_88 = arith.constant 0 : index
    %c0_89 = arith.constant 0 : index
    %190 = vector.load %arg8[%c0_88, %c0_89] : memref<16x128xf32, #tpu.memory_space<vmem>>, vector<16x128xf32>
    tpu.vector_store %arg8[%c0_88, %c0_89], %189 {strides = array<i32>} : memref<16x128xf32, #tpu.memory_space<vmem>>, vector<16x128xf32>,
    %cst_90 = arith.constant 0.000000e+00 : f32
    %191 = vector.broadcast %cst_90 : f32 to vector<32x100xf32>
    %192 = tpu.concatenate %73, %90, %107, %124, %139, %187, %191 in 1 : vector<32x32xf32>, vector<32x32xf32>, vector<32x64xf32>, vector<32x8xf32>, vector<32x4xf32>, vector<32x16xf32>, vector<32x100xf32> -> vector<32x256xf32>
    %c0_91 = arith.constant 0 : index
    %c0_92 = arith.constant 0 : index
    %193 = vector.load %arg9[%c0_91, %c0_92] : memref<32x256xf32, #tpu.memory_space<vmem>>, vector<32x256xf32>
    tpu.vector_store %arg9[%c0_91, %c0_92], %192 {strides = array<i32>} : memref<32x256xf32, #tpu.memory_space<vmem>>, vector<32x256xf32>,
    return
  }
  func.func @transform_0(%arg0: i32) -> (i32, i32) {
    %c0_i32 = arith.constant 0 : i32
    %c0_i32_0 = arith.constant 0 : i32
    %c0_i32_1 = arith.constant 0 : i32
    return %c0_i32, %c0_i32_0 : i32, i32
  }
  func.func @transform_1(%arg0: i32) -> (i32, i32) {
    %c0_i32 = arith.constant 0 : i32
    %c0_i32_0 = arith.constant 0 : i32
    %c0_i32_1 = arith.constant 0 : i32
    return %c0_i32, %c0_i32_0 : i32, i32
  }
  func.func @transform_2(%arg0: i32) -> (i32, i32) {
    %c0_i32 = arith.constant 0 : i32
    %c0_i32_0 = arith.constant 0 : i32
    %c0_i32_1 = arith.constant 0 : i32
    return %c0_i32, %c0_i32_0 : i32, i32
  }
  func.func @transform_3(%arg0: i32) -> (i32, i32) {
    %c0_i32 = arith.constant 0 : i32
    %c0_i32_0 = arith.constant 0 : i32
    %c0_i32_1 = arith.constant 0 : i32
    return %c0_i32, %c0_i32_0 : i32, i32
  }
  func.func @transform_4(%arg0: i32) -> (i32, i32) {
    %c0_i32 = arith.constant 0 : i32
    %c0_i32_0 = arith.constant 0 : i32
    %c0_i32_1 = arith.constant 0 : i32
    return %c0_i32, %c0_i32_0 : i32, i32
  }
  func.func @transform_5(%arg0: i32) -> (i32, i32) {
    %c0_i32 = arith.constant 0 : i32
    %c0_i32_0 = arith.constant 0 : i32
    %c0_i32_1 = arith.constant 0 : i32
    return %c0_i32, %c0_i32_0 : i32, i32
  }
  func.func @transform_6(%arg0: i32) -> (i32, i32) {
    %c0_i32 = arith.constant 0 : i32
    %c0_i32_0 = arith.constant 0 : i32
    %c0_i32_1 = arith.constant 0 : i32
    return %c0_i32, %c0_i32_0 : i32, i32
  }
  func.func @transform_7(%arg0: i32) -> (i32, i32) {
    %c0_i32 = arith.constant 0 : i32
    %c0_i32_0 = arith.constant 0 : i32
    %c0_i32_1 = arith.constant 0 : i32
    return %c0_i32, %c0_i32_0 : i32, i32
  }
  func.func @transform_8(%arg0: i32) -> (i32, i32) {
    %c0_i32 = arith.constant 0 : i32
    %c0_i32_0 = arith.constant 0 : i32
    %c0_i32_1 = arith.constant 0 : i32
    return %c0_i32, %c0_i32_0 : i32, i32
  }
}

</mosaic_0001>

<llo_original>
// kernel: sdcn_forward.1
$region0: #{sdcn_forward.1}
  #allocation0 [shape = 'u32[]', space=smem, size = 0x4, offset = 0x4, fixed_abs, tag = 'smem constant byte address 0x4 - core index']
  #allocation1 [shape = 'u32[144,128]{1,0:T(1,128)}', space=vmem, size = 0x12000, scoped, tag = 'internal scratch']
  %s0 = inlined_call_operand.vmem [shape: f32[16,16], index: 0, kind: input, shape index: {}]
  %s1 = inlined_call_operand.vmem [shape: bf16[48,16], index: 1, kind: input, shape index: {}]
  %s2 = inlined_call_operand.vmem [shape: f32[64,16], index: 2, kind: input, shape index: {}]
  %s3 = inlined_call_operand.vmem [shape: bf16[448,128], index: 3, kind: input, shape index: {}]
  %s4 = inlined_call_operand.vmem [shape: f32[16,128], index: 4, kind: input, shape index: {}]
  %s5 = inlined_call_operand.vmem [shape: f32[16,16], index: 5, kind: input, shape index: {}]
  %s6 = inlined_call_operand.vmem [shape: f32[8,4], index: 6, kind: input, shape index: {}]
  %s7 = inlined_call_operand.vmem [shape: f32[16,128], index: 7, kind: output, shape index: {0}]
  %s8 = inlined_call_operand.vmem [shape: f32[32,256], index: 8, kind: output, shape index: {1}]
  %9 = xla_tuple %s7, %s8
  %s10 = sld [smem:[#allocation0]]
  $region46: #{sdcn_forward.1} parent=0
    _
  %s12 = ssub.s32 1, %s10
  %s13 = scalar_select 0, %s12, %s10
  // Predicated region
  $region2: #{sdcn_forward.1} parent=0 // pred_check
    _
  $region3: #{sdcn_forward.1} parent=0 // pred_check_branch
    %15 = sbr.rel (0) target = $region5
  $region4: #{sdcn_forward.1} parent=0 // pred_region
    _
  $region5: #{sdcn_forward.1} parent=0 // pred_fallthru
    _
  // Predicated region
  $region6: #{sdcn_forward.1} parent=0 // pred_check
    _
  $region7: #{sdcn_forward.1} parent=0 // pred_check_branch
    %17 = sbr.rel (0) target = $region9
  $region8: #{sdcn_forward.1} parent=0 // pred_region
    _
  $region9: #{sdcn_forward.1} parent=0 // pred_fallthru
    _
  // Predicated region
  $region10: #{sdcn_forward.1} parent=0 // pred_check
    _
  $region11: #{sdcn_forward.1} parent=0 // pred_check_branch
    %19 = sbr.rel (0) target = $region13
  $region12: #{sdcn_forward.1} parent=0 // pred_region
    _
  $region13: #{sdcn_forward.1} parent=0 // pred_fallthru
    _
  // Predicated region
  $region14: #{sdcn_forward.1} parent=0 // pred_check
    _
  $region15: #{sdcn_forward.1} parent=0 // pred_check_branch
    %21 = sbr.rel (0) target = $region17
  $region16: #{sdcn_forward.1} parent=0 // pred_region
    _
  $region17: #{sdcn_forward.1} parent=0 // pred_fallthru
    _
  // Predicated region
  $region18: #{sdcn_forward.1} parent=0 // pred_check
    _
  $region19: #{sdcn_forward.1} parent=0 // pred_check_branch
    %23 = sbr.rel (0) target = $region21
  $region20: #{sdcn_forward.1} parent=0 // pred_region
    _
  $region21: #{sdcn_forward.1} parent=0 // pred_fallthru
    _
  // Predicated region
  $region22: #{sdcn_forward.1} parent=0 // pred_check
    _
  $region23: #{sdcn_forward.1} parent=0 // pred_check_branch
    %25 = sbr.rel (0) target = $region25
  $region24: #{sdcn_forward.1} parent=0 // pred_region
    _
  $region25: #{sdcn_forward.1} parent=0 // pred_fallthru
    _
  // Predicated region
  $region26: #{sdcn_forward.1} parent=0 // pred_check
    _
  $region27: #{sdcn_forward.1} parent=0 // pred_check_branch
    %27 = sbr.rel (0) target = $region29
  $region28: #{sdcn_forward.1} parent=0 // pred_region
    _
  $region29: #{sdcn_forward.1} parent=0 // pred_fallthru
    _
  %v29 = vld [vmem:[%s0] sm:$0xff]
  %v30 = vld [vmem:[%s0 + $0x8] sm:$0xff]
  %v31 = vld [vmem:[%s3] sm:$0xf]
  %v32 = vld [vmem:[%s3 + $0x4] sm:$0xf]
  %v33 = vld [vmem:[%s4] sm:$0x1]
  %v34 = vpack.c.bf16 %v30, %v29
  %v35 = vlaneseq
  %v36 = vshrl.u32 %v35, 7
  %v37 = vsub.s32 0, %v36
  %v38 = vrot.slane %v33, %v37
  %v41 = vunpack.c.l.b16 %v31
  %v42 = vunpack.c.l.b16 %v32
  %v43 = vpack.c.b16 %v42, %v41
  %vm45 = vcmask 130048
  %v47 = vsel %vm45, %v34, 0
  %49 = vmatprep.subr.bf16.mxu0 0
  %50 = vmatpush1.bf16.msra.mxu0 %v43
  %51 = vmatprep.subr.bf16.mxu0 0
  %52 = vmatpush1.bf16.msra.mxu0 0
  %53 = vmatprep.subr.bf16.mxu0 0
  %54 = vmatpush1.bf16.msra.mxu0 0
  %55 = vmatprep.subr.bf16.mxu0 0
  %56 = vmatpush1.bf16.msra.mxu0 0
  %57 = vmatprep.subr.bf16.mxu0 0
  %58 = vmatpush1.bf16.msra.mxu0 0
  %59 = vmatprep.subr.bf16.mxu0 0
  %60 = vmatpush1.bf16.msra.mxu0 0
  %61 = vmatprep.subr.bf16.mxu0 0
  %62 = vmatpush1.bf16.msra.mxu0 0
  %63 = vmatprep.subr.bf16.mxu0 0
  %64 = vmatpush1.bf16.msra.mxu0 0
  %65 = vmatprep.subr.bf16.mxu0 0
  %66 = vmatpush1.bf16.msra.mxu0 0
  %67 = vmatprep.subr.bf16.mxu0 0
  %68 = vmatpush1.bf16.msra.mxu0 0
  %69 = vmatprep.subr.bf16.mxu0 0
  %70 = vmatpush1.bf16.msra.mxu0 0
  %71 = vmatprep.subr.bf16.mxu0 0
  %72 = vmatpush1.bf16.msra.mxu0 0
  %73 = vmatprep.subr.bf16.mxu0 0
  %74 = vmatpush1.bf16.msra.mxu0 0
  %75 = vmatprep.subr.bf16.mxu0 0
  %76 = vmatpush1.bf16.msra.mxu0 0
  %77 = vmatprep.subr.bf16.mxu0 0
  %78 = vmatpush1.bf16.msra.mxu0 0
  %79 = vmatprep.subr.bf16.mxu0 0
  %80 = vmatpush1.bf16.msra.mxu0 0
  %81 = vmatprep.mubr.bf16.mxu0 0
  %82 = vmatmul.mubr.bf16.gmra.mrb[0].mxu0 %v47
  %v83 = vpop.f32.mrb[0].mxu0
  %v84 = vadd.f32 %v38, %v83
  %v85 = vpop.f32.mrb[0].mxu0
  %v86 = vpop.f32.mrb[0].mxu0
  %v87 = vadd.f32 %v38, %v86
  %v88 = vpop.f32.mrb[0].mxu0
  %89 = vdwg.mxu0
  %v90 = vmax.f32 %v84, 0.0
  %v91 = vmax.f32 %v87, 0.0
  %v92 = vld [vmem:[%s3 + $0x8] sm:$0xf]
  %v93 = vld [vmem:[%s3 + $0xc] sm:$0xf]
  %v94 = vld [vmem:[%s3 + $0x10] sm:$0xf]
  %v95 = vld [vmem:[%s3 + $0x14] sm:$0xf]
  %v96 = vld [vmem:[%s4 + $0x1] sm:$0x1]
  %v97 = vpack.c.bf16 %v91, %v90
  %v98 = vlaneseq
  %v99 = vshrl.u32 %v98, 7
  %v100 = vsub.s32 0, %v99
  %v101 = vrot.slane %v96, %v100
  %v106 = vunpack.c.l.b16 %v92
  %v107 = vunpack.c.l.b16 %v93
  %v108 = vunpack.c.l.b16 %v94
  %v109 = vunpack.c.l.b16 %v95
  %v110 = vpack.c.b16 %v107, %v106
  %v111 = vpack.c.b16 %v109, %v108
  %vm114 = vcmask 261120
  %v116 = vsel %vm114, %v97, 0
  %118 = vmatprep.subr.bf16.mxu0 0
  %119 = vmatpush1.bf16.msra.mxu0 %v110
  %120 = vmatprep.subr.bf16.mxu0 0
  %121 = vmatpush1.bf16.msra.mxu0 %v111
  %122 = vmatprep.subr.bf16.mxu0 0
  %123 = vmatpush1.bf16.msra.mxu0 0
  %124 = vmatprep.subr.bf16.mxu0 0
  %125 = vmatpush1.bf16.msra.mxu0 0
  %126 = vmatprep.subr.bf16.mxu0 0
  %127 = vmatpush1.bf16.msra.mxu0 0
  %128 = vmatprep.subr.bf16.mxu0 0
  %129 = vmatpush1.bf16.msra.mxu0 0
  %130 = vmatprep.subr.bf16.mxu0 0
  %131 = vmatpush1.bf16.msra.mxu0 0
  %132 = vmatprep.subr.bf16.mxu0 0
  %133 = vmatpush1.bf16.msra.mxu0 0
  %134 = vmatprep.subr.bf16.mxu0 0
  %135 = vmatpush1.bf16.msra.mxu0 0
  %136 = vmatprep.subr.bf16.mxu0 0
  %137 = vmatpush1.bf16.msra.mxu0 0
  %138 = vmatprep.subr.bf16.mxu0 0
  %139 = vmatpush1.bf16.msra.mxu0 0
  %140 = vmatprep.subr.bf16.mxu0 0
  %141 = vmatpush1.bf16.msra.mxu0 0
  %142 = vmatprep.subr.bf16.mxu0 0
  %143 = vmatpush1.bf16.msra.mxu0 0
  %144 = vmatprep.subr.bf16.mxu0 0
  %145 = vmatpush1.bf16.msra.mxu0 0
  %146 = vmatprep.subr.bf16.mxu0 0
  %147 = vmatpush1.bf16.msra.mxu0 0
  %148 = vmatprep.subr.bf16.mxu0 0
  %149 = vmatpush1.bf16.msra.mxu0 0
  %150 = vmatprep.mubr.bf16.mxu0 0
  %151 = vmatmul.mubr.bf16.gmra.mrb[0].mxu0 %v116
  %v152 = vpop.f32.mrb[0].mxu0
  %v153 = vadd.f32 %v101, %v152
  %v154 = vpop.f32.mrb[0].mxu0
  %v155 = vpop.f32.mrb[0].mxu0
  %v156 = vadd.f32 %v101, %v155
  %v157 = vpop.f32.mrb[0].mxu0
  %158 = vdwg.mxu0
  %v159 = vmax.f32 %v153, 0.0
  %v160 = vmax.f32 %v156, 0.0
  %v161 = vld [vmem:[%s3 + $0x18] sm:$0xf]
  %v162 = vld [vmem:[%s3 + $0x1c] sm:$0xf]
  %v163 = vld [vmem:[%s3 + $0x20] sm:$0xf]
  %v164 = vld [vmem:[%s3 + $0x24] sm:$0xf]
  %v165 = vld [vmem:[%s4 + $0x2] sm:$0x1]
  %v166 = vpack.c.bf16 %v160, %v159
  %v167 = vlaneseq
  %v168 = vshrl.u32 %v167, 7
  %v169 = vsub.s32 0, %v168
  %v170 = vrot.slane %v165, %v169
  %v175 = vunpack.c.l.b16 %v161
  %v176 = vunpack.c.l.b16 %v162
  %v177 = vunpack.c.l.b16 %v163
  %v178 = vunpack.c.l.b16 %v164
  %v179 = vpack.c.b16 %v176, %v175
  %v180 = vpack.c.b16 %v178, %v177
  %v184 = vsel %vm114, %v166, 0
  %186 = vmatprep.subr.bf16.mxu0 0
  %187 = vmatpush1.bf16.msra.mxu0 %v179
  %188 = vmatprep.subr.bf16.mxu0 0
  %189 = vmatpush1.bf16.msra.mxu0 %v180
  %190 = vmatprep.subr.bf16.mxu0 0
  %191 = vmatpush1.bf16.msra.mxu0 0
  %192 = vmatprep.subr.bf16.mxu0 0
  %193 = vmatpush1.bf16.msra.mxu0 0
  %194 = vmatprep.subr.bf16.mxu0 0
  %195 = vmatpush1.bf16.msra.mxu0 0
  %196 = vmatprep.subr.bf16.mxu0 0
  %197 = vmatpush1.bf16.msra.mxu0 0
  %198 = vmatprep.subr.bf16.mxu0 0
  %199 = vmatpush1.bf16.msra.mxu0 0
  %200 = vmatprep.subr.bf16.mxu0 0
  %201 = vmatpush1.bf16.msra.mxu0 0
  %202 = vmatprep.subr.bf16.mxu0 0
  %203 = vmatpush1.bf16.msra.mxu0 0
  %204 = vmatprep.subr.bf16.mxu0 0
  %205 = vmatpush1.bf16.msra.mxu0 0
  %206 = vmatprep.subr.bf16.mxu0 0
  %207 = vmatpush1.bf16.msra.mxu0 0
  %208 = vmatprep.subr.bf16.mxu0 0
  %209 = vmatpush1.bf16.msra.mxu0 0
  %210 = vmatprep.subr.bf16.mxu0 0
  %211 = vmatpush1.bf16.msra.mxu0 0
  %212 = vmatprep.subr.bf16.mxu0 0
  %213 = vmatpush1.bf16.msra.mxu0 0
  %214 = vmatprep.subr.bf16.mxu0 0
  %215 = vmatpush1.bf16.msra.mxu0 0
  %216 = vmatprep.subr.bf16.mxu0 0
  %217 = vmatpush1.bf16.msra.mxu0 0
  %218 = vmatprep.mubr.bf16.mxu0 0
  %219 = vmatmul.mubr.bf16.gmra.mrb[0].mxu0 %v184
  %v220 = vpop.f32.mrb[0].mxu0
  %v221 = vadd.f32 %v170, %v220
  %v222 = vpop.f32.mrb[0].mxu0
  %v223 = vpop.f32.mrb[0].mxu0
  %v224 = vadd.f32 %v170, %v223
  %v225 = vpop.f32.mrb[0].mxu0
  %226 = vdwg.mxu0
  %v227 = vmax.f32 %v221, 0.0
  %v228 = vmax.f32 %v224, 0.0
  %v229 = vld [vmem:[%s3 + $0x28] sm:$0xf]
  %v230 = vld [vmem:[%s3 + $0x2c] sm:$0xf]
  %v231 = vld [vmem:[%s3 + $0x30] sm:$0xf]
  %v232 = vld [vmem:[%s3 + $0x34] sm:$0xf]
  %v233 = vld [vmem:[%s3 + $0x38] sm:$0xf]
  %v234 = vld [vmem:[%s3 + $0x3c] sm:$0xf]
  %v235 = vld [vmem:[%s3 + $0x40] sm:$0xf]
  %v236 = vld [vmem:[%s3 + $0x44] sm:$0xf]
  %v237 = vld [vmem:[%s4 + $0x3] sm:$0x1]
  %v238 = vpack.c.bf16 %v228, %v227
  %v239 = vlaneseq
  %v240 = vshrl.u32 %v239, 7
  %v241 = vsub.s32 0, %v240
  %v242 = vrot.slane %v237, %v241
  %v251 = vunpack.c.l.b16 %v229
  %v252 = vunpack.c.l.b16 %v230
  %v253 = vunpack.c.l.b16 %v231
  %v254 = vunpack.c.l.b16 %v232
  %v255 = vunpack.c.l.b16 %v233
  %v256 = vunpack.c.l.b16 %v234
  %v257 = vunpack.c.l.b16 %v235
  %v258 = vunpack.c.l.b16 %v236
  %v259 = vpack.c.b16 %v252, %v251
  %v260 = vpack.c.b16 %v254, %v253
  %v261 = vpack.c.b16 %v256, %v255
  %v262 = vpack.c.b16 %v258, %v257
  %vm267 = vcmask 523264
  %v269 = vsel %vm267, %v238, 0
  %271 = vmatprep.subr.bf16.mxu0 0
  %272 = vmatpush1.bf16.msra.mxu0 %v259
  %273 = vmatprep.subr.bf16.mxu0 0
  %274 = vmatpush1.bf16.msra.mxu0 %v260
  %275 = vmatprep.subr.bf16.mxu0 0
  %276 = vmatpush1.bf16.msra.mxu0 %v261
  %277 = vmatprep.subr.bf16.mxu0 0
  %278 = vmatpush1.bf16.msra.mxu0 %v262
  %279 = vmatprep.subr.bf16.mxu0 0
  %280 = vmatpush1.bf16.msra.mxu0 0
  %281 = vmatprep.subr.bf16.mxu0 0
  %282 = vmatpush1.bf16.msra.mxu0 0
  %283 = vmatprep.subr.bf16.mxu0 0
  %284 = vmatpush1.bf16.msra.mxu0 0
  %285 = vmatprep.subr.bf16.mxu0 0
  %286 = vmatpush1.bf16.msra.mxu0 0
  %287 = vmatprep.subr.bf16.mxu0 0
  %288 = vmatpush1.bf16.msra.mxu0 0
  %289 = vmatprep.subr.bf16.mxu0 0
  %290 = vmatpush1.bf16.msra.mxu0 0
  %291 = vmatprep.subr.bf16.mxu0 0
  %292 = vmatpush1.bf16.msra.mxu0 0
  %293 = vmatprep.subr.bf16.mxu0 0
  %294 = vmatpush1.bf16.msra.mxu0 0
  %295 = vmatprep.subr.bf16.mxu0 0
  %296 = vmatpush1.bf16.msra.mxu0 0
  %297 = vmatprep.subr.bf16.mxu0 0
  %298 = vmatpush1.bf16.msra.mxu0 0
  %299 = vmatprep.subr.bf16.mxu0 0
  %300 = vmatpush1.bf16.msra.mxu0 0
  %301 = vmatprep.subr.bf16.mxu0 0
  %302 = vmatpush1.bf16.msra.mxu0 0
  %303 = vmatprep.mubr.bf16.mxu0 0
  %304 = vmatmul.mubr.bf16.gmra.mrb[0].mxu0 %v269
  %v305 = vpop.f32.mrb[0].mxu0
  %v306 = vadd.f32 %v242, %v305
  %v307 = vpop.f32.mrb[0].mxu0
  %v308 = vpop.f32.mrb[0].mxu0
  %v309 = vadd.f32 %v242, %v308
  %v310 = vpop.f32.mrb[0].mxu0
  %311 = vdwg.mxu0
  %v312 = vld [vmem:[%s3 + $0x48] sm:$0xf]
  %v313 = vld [vmem:[%s4 + $0x4] sm:$0x1]
  %v314 = vpack.c.bf16 %v309, %v306
  %v315 = vlaneseq
  %v316 = vshrl.u32 %v315, 7
  %v317 = vsub.s32 0, %v316
  %v318 = vrot.slane %v313, %v317
  %vm319 = vcmask 64512
  %v321 = vsel %vm319, %v314, 0
  %vm323 = vcmask 1043456
  %v325 = vsel %vm323, %v312, 0
  %327 = vmatprep.subr.bf16.mxu0 0
  %328 = vmatpush1.bf16.msra.mxu0 %v325
  %329 = vmatprep.subr.bf16.mxu0 0
  %330 = vmatpush1.bf16.msra.mxu0 0
  %331 = vmatprep.subr.bf16.mxu0 0
  %332 = vmatpush1.bf16.msra.mxu0 0
  %333 = vmatprep.subr.bf16.mxu0 0
  %334 = vmatpush1.bf16.msra.mxu0 0
  %335 = vmatprep.subr.bf16.mxu0 0
  %336 = vmatpush1.bf16.msra.mxu0 0
  %337 = vmatprep.subr.bf16.mxu0 0
  %338 = vmatpush1.bf16.msra.mxu0 0
  %339 = vmatprep.subr.bf16.mxu0 0
  %340 = vmatpush1.bf16.msra.mxu0 0
  %341 = vmatprep.subr.bf16.mxu0 0
  %342 = vmatpush1.bf16.msra.mxu0 0
  %343 = vmatprep.subr.bf16.mxu0 0
  %344 = vmatpush1.bf16.msra.mxu0 0
  %345 = vmatprep.subr.bf16.mxu0 0
  %346 = vmatpush1.bf16.msra.mxu0 0
  %347 = vmatprep.subr.bf16.mxu0 0
  %348 = vmatpush1.bf16.msra.mxu0 0
  %349 = vmatprep.subr.bf16.mxu0 0
  %350 = vmatpush1.bf16.msra.mxu0 0
  %351 = vmatprep.subr.bf16.mxu0 0
  %352 = vmatpush1.bf16.msra.mxu0 0
  %353 = vmatprep.subr.bf16.mxu0 0
  %354 = vmatpush1.bf16.msra.mxu0 0
  %355 = vmatprep.subr.bf16.mxu0 0
  %356 = vmatpush1.bf16.msra.mxu0 0
  %357 = vmatprep.subr.bf16.mxu0 0
  %358 = vmatpush1.bf16.msra.mxu0 0
  %359 = vmatprep.mubr.bf16.mxu0 0
  %360 = vmatmul.mubr.bf16.gmra.mrb[0].mxu0 %v321
  %v361 = vpop.f32.mrb[0].mxu0
  %v362 = vadd.f32 %v318, %v361
  %v363 = vpop.f32.mrb[0].mxu0
  %v364 = vpop.f32.mrb[0].mxu0
  %v365 = vadd.f32 %v318, %v364
  %v366 = vpop.f32.mrb[0].mxu0
  %367 = vdwg.mxu0
  %v368 = vmax.f32 %v362, 0.0
  %v369 = vmax.f32 %v365, 0.0
  %v370 = vld [vmem:[%s3 + $0x50] sm:$0xf]
  %v371 = vld [vmem:[%s3 + $0x54] sm:$0xf]
  %v372 = vld [vmem:[%s3 + $0x58] sm:$0xf]
  %v373 = vld [vmem:[%s3 + $0x5c] sm:$0xf]
  %v374 = vld [vmem:[%s3 + $0x60] sm:$0xf]
  %v375 = vld [vmem:[%s3 + $0x64] sm:$0xf]
  %v376 = vld [vmem:[%s3 + $0x68] sm:$0xf]
  %v377 = vld [vmem:[%s3 + $0x6c] sm:$0xf]
  %v378 = vld [vmem:[%s4 + $0x5] sm:$0x1]
  %v379 = vpack.c.bf16 %v369, %v368
  %v380 = vlaneseq
  %v381 = vshrl.u32 %v380, 7
  %v382 = vsub.s32 0, %v381
  %v383 = vrot.slane %v378, %v382
  %v392 = vunpack.c.l.b16 %v370
  %v393 = vunpack.c.l.b16 %v371
  %v394 = vunpack.c.l.b16 %v372
  %v395 = vunpack.c.l.b16 %v373
  %v396 = vunpack.c.l.b16 %v374
  %v397 = vunpack.c.l.b16 %v375
  %v398 = vunpack.c.l.b16 %v376
  %v399 = vunpack.c.l.b16 %v377
  %v400 = vpack.c.b16 %v393, %v392
  %v401 = vpack.c.b16 %v395, %v394
  %v402 = vpack.c.b16 %v397, %v396
  %v403 = vpack.c.b16 %v399, %v398
  %v409 = vsel %vm267, %v379, 0
  %411 = vmatprep.subr.bf16.mxu0 0
  %412 = vmatpush1.bf16.msra.mxu0 %v400
  %413 = vmatprep.subr.bf16.mxu0 0
  %414 = vmatpush1.bf16.msra.mxu0 %v401
  %415 = vmatprep.subr.bf16.mxu0 0
  %416 = vmatpush1.bf16.msra.mxu0 %v402
  %417 = vmatprep.subr.bf16.mxu0 0
  %418 = vmatpush1.bf16.msra.mxu0 %v403
  %419 = vmatprep.subr.bf16.mxu0 0
  %420 = vmatpush1.bf16.msra.mxu0 0
  %421 = vmatprep.subr.bf16.mxu0 0
  %422 = vmatpush1.bf16.msra.mxu0 0
  %423 = vmatprep.subr.bf16.mxu0 0
  %424 = vmatpush1.bf16.msra.mxu0 0
  %425 = vmatprep.subr.bf16.mxu0 0
  %426 = vmatpush1.bf16.msra.mxu0 0
  %427 = vmatprep.subr.bf16.mxu0 0
  %428 = vmatpush1.bf16.msra.mxu0 0
  %429 = vmatprep.subr.bf16.mxu0 0
  %430 = vmatpush1.bf16.msra.mxu0 0
  %431 = vmatprep.subr.bf16.mxu0 0
  %432 = vmatpush1.bf16.msra.mxu0 0
  %433 = vmatprep.subr.bf16.mxu0 0
  %434 = vmatpush1.bf16.msra.mxu0 0
  %435 = vmatprep.subr.bf16.mxu0 0
  %436 = vmatpush1.bf16.msra.mxu0 0
  %437 = vmatprep.subr.bf16.mxu0 0
  %438 = vmatpush1.bf16.msra.mxu0 0
  %439 = vmatprep.subr.bf16.mxu0 0
  %440 = vmatpush1.bf16.msra.mxu0 0
  %441 = vmatprep.subr.bf16.mxu0 0
  %442 = vmatpush1.bf16.msra.mxu0 0
  %443 = vmatprep.mubr.bf16.mxu0 0
  %444 = vmatmul.mubr.bf16.gmra.mrb[0].mxu0 %v409
  %v445 = vpop.f32.mrb[0].mxu0
  %v446 = vadd.f32 %v383, %v445
  %v447 = vpop.f32.mrb[0].mxu0
  %v448 = vpop.f32.mrb[0].mxu0
  %v449 = vadd.f32 %v383, %v448
  %v450 = vpop.f32.mrb[0].mxu0
  %451 = vdwg.mxu0
  %v452 = vmax.f32 %v446, 0.0
  %v453 = vmax.f32 %v449, 0.0
  %v454 = vld [vmem:[%s3 + $0x70] sm:$0xf]
  %v455 = vld [vmem:[%s3 + $0x74] sm:$0xf]
  %v456 = vld [vmem:[%s3 + $0x78] sm:$0xf]
  %v457 = vld [vmem:[%s3 + $0x7c] sm:$0xf]
  %v458 = vld [vmem:[%s4 + $0x6] sm:$0x1]
  %v459 = vpack.c.bf16 %v453, %v452
  %v460 = vlaneseq
  %v461 = vshrl.u32 %v460, 7
  %v462 = vsub.s32 0, %v461
  %v463 = vrot.slane %v458, %v462
  %v468 = vunpack.c.l.b16 %v454
  %v469 = vunpack.c.l.b16 %v455
  %v470 = vunpack.c.l.b16 %v456
  %v471 = vunpack.c.l.b16 %v457
  %v472 = vpack.c.b16 %v469, %v468
  %v473 = vpack.c.b16 %v471, %v470
  %v477 = vsel %vm114, %v459, 0
  %479 = vmatprep.subr.bf16.mxu0 0
  %480 = vmatpush1.bf16.msra.mxu0 %v472
  %481 = vmatprep.subr.bf16.mxu0 0
  %482 = vmatpush1.bf16.msra.mxu0 %v473
  %483 = vmatprep.subr.bf16.mxu0 0
  %484 = vmatpush1.bf16.msra.mxu0 0
  %485 = vmatprep.subr.bf16.mxu0 0
  %486 = vmatpush1.bf16.msra.mxu0 0
  %487 = vmatprep.subr.bf16.mxu0 0
  %488 = vmatpush1.bf16.msra.mxu0 0
  %489 = vmatprep.subr.bf16.mxu0 0
  %490 = vmatpush1.bf16.msra.mxu0 0
  %491 = vmatprep.subr.bf16.mxu0 0
  %492 = vmatpush1.bf16.msra.mxu0 0
  %493 = vmatprep.subr.bf16.mxu0 0
  %494 = vmatpush1.bf16.msra.mxu0 0
  %495 = vmatprep.subr.bf16.mxu0 0
  %496 = vmatpush1.bf16.msra.mxu0 0
  %497 = vmatprep.subr.bf16.mxu0 0
  %498 = vmatpush1.bf16.msra.mxu0 0
  %499 = vmatprep.subr.bf16.mxu0 0
  %500 = vmatpush1.bf16.msra.mxu0 0
  %501 = vmatprep.subr.bf16.mxu0 0
  %502 = vmatpush1.bf16.msra.mxu0 0
  %503 = vmatprep.subr.bf16.mxu0 0
  %504 = vmatpush1.bf16.msra.mxu0 0
  %505 = vmatprep.subr.bf16.mxu0 0
  %506 = vmatpush1.bf16.msra.mxu0 0
  %507 = vmatprep.subr.bf16.mxu0 0
  %508 = vmatpush1.bf16.msra.mxu0 0
  %509 = vmatprep.subr.bf16.mxu0 0
  %510 = vmatpush1.bf16.msra.mxu0 0
  %511 = vmatprep.mubr.bf16.mxu0 0
  %512 = vmatmul.mubr.bf16.gmra.mrb[0].mxu0 %v477
  %v513 = vpop.f32.mrb[0].mxu0
  %v514 = vadd.f32 %v463, %v513
  %v515 = vpop.f32.mrb[0].mxu0
  %v516 = vpop.f32.mrb[0].mxu0
  %v517 = vadd.f32 %v463, %v516
  %v518 = vpop.f32.mrb[0].mxu0
  %519 = vdwg.mxu0
  %v520 = vmax.f32 %v514, 0.0
  %v521 = vmax.f32 %v517, 0.0
  %v522 = vld [vmem:[%s3 + $0x80] sm:$0xf]
  %v523 = vld [vmem:[%s3 + $0x84] sm:$0xf]
  %v524 = vld [vmem:[%s3 + $0x88] sm:$0xf]
  %v525 = vld [vmem:[%s3 + $0x8c] sm:$0xf]
  %v526 = vld [vmem:[%s4 + $0x7] sm:$0x1]
  %v527 = vpack.c.bf16 %v521, %v520
  %v528 = vlaneseq
  %v529 = vshrl.u32 %v528, 7
  %v530 = vsub.s32 0, %v529
  %v531 = vrot.slane %v526, %v530
  %v536 = vunpack.c.l.b16 %v522
  %v537 = vunpack.c.l.b16 %v523
  %v538 = vunpack.c.l.b16 %v524
  %v539 = vunpack.c.l.b16 %v525
  %v540 = vpack.c.b16 %v537, %v536
  %v541 = vpack.c.b16 %v539, %v538
  %v545 = vsel %vm114, %v527, 0
  %547 = vmatprep.subr.bf16.mxu0 0
  %548 = vmatpush1.bf16.msra.mxu0 %v540
  %549 = vmatprep.subr.bf16.mxu0 0
  %550 = vmatpush1.bf16.msra.mxu0 %v541
  %551 = vmatprep.subr.bf16.mxu0 0
  %552 = vmatpush1.bf16.msra.mxu0 0
  %553 = vmatprep.subr.bf16.mxu0 0
  %554 = vmatpush1.bf16.msra.mxu0 0
  %555 = vmatprep.subr.bf16.mxu0 0
  %556 = vmatpush1.bf16.msra.mxu0 0
  %557 = vmatprep.subr.bf16.mxu0 0
  %558 = vmatpush1.bf16.msra.mxu0 0
  %559 = vmatprep.subr.bf16.mxu0 0
  %560 = vmatpush1.bf16.msra.mxu0 0
  %561 = vmatprep.subr.bf16.mxu0 0
  %562 = vmatpush1.bf16.msra.mxu0 0
  %563 = vmatprep.subr.bf16.mxu0 0
  %564 = vmatpush1.bf16.msra.mxu0 0
  %565 = vmatprep.subr.bf16.mxu0 0
  %566 = vmatpush1.bf16.msra.mxu0 0
  %567 = vmatprep.subr.bf16.mxu0 0
  %568 = vmatpush1.bf16.msra.mxu0 0
  %569 = vmatprep.subr.bf16.mxu0 0
  %570 = vmatpush1.bf16.msra.mxu0 0
  %571 = vmatprep.subr.bf16.mxu0 0
  %572 = vmatpush1.bf16.msra.mxu0 0
  %573 = vmatprep.subr.bf16.mxu0 0
  %574 = vmatpush1.bf16.msra.mxu0 0
  %575 = vmatprep.subr.bf16.mxu0 0
  %576 = vmatpush1.bf16.msra.mxu0 0
  %577 = vmatprep.subr.bf16.mxu0 0
  %578 = vmatpush1.bf16.msra.mxu0 0
  %579 = vmatprep.mubr.bf16.mxu0 0
  %580 = vmatmul.mubr.bf16.gmra.mrb[0].mxu0 %v545
  %v581 = vpop.f32.mrb[0].mxu0
  %v582 = vadd.f32 %v531, %v581
  %v583 = vpop.f32.mrb[0].mxu0
  %v584 = vpop.f32.mrb[0].mxu0
  %v585 = vadd.f32 %v531, %v584
  %v586 = vpop.f32.mrb[0].mxu0
  %587 = vdwg.mxu0
  %v588 = vld [vmem:[%s1] sm:$0xf]
  %v589 = vld [vmem:[%s1 + $0x4] sm:$0xf]
  %v590 = vld [vmem:[%s1 + $0x8] sm:$0xf]
  %v591 = vld [vmem:[%s1 + $0xc] sm:$0xf]
  %v592 = vld [vmem:[%s1 + $0x10] sm:$0xf]
  %v593 = vld [vmem:[%s1 + $0x14] sm:$0xf]
  %v594 = vld [vmem:[%s3 + $0x90] sm:$0xf]
  %v595 = vld [vmem:[%s3 + $0x94] sm:$0xf]
  %v596 = vld [vmem:[%s4 + $0x8] sm:$0x1]
  %v597 = vlaneseq
  %v598 = vshrl.u32 %v597, 7
  %v599 = vsub.s32 0, %v598
  %v600 = vrot.slane %v596, %v599
  %v603 = vunpack.c.l.b16 %v594
  %v604 = vunpack.c.l.b16 %v595
  %v605 = vpack.c.b16 %v604, %v603
  %607 = vmatprep.subr.bf16.mxu0 0
  %608 = vmatpush1.bf16.msra.mxu0 %v605
  %609 = vmatprep.subr.bf16.mxu0 0
  %610 = vmatpush1.bf16.msra.mxu0 0
  %611 = vmatprep.subr.bf16.mxu0 0
  %612 = vmatpush1.bf16.msra.mxu0 0
  %613 = vmatprep.subr.bf16.mxu0 0
  %614 = vmatpush1.bf16.msra.mxu0 0
  %615 = vmatprep.subr.bf16.mxu0 0
  %616 = vmatpush1.bf16.msra.mxu0 0
  %617 = vmatprep.subr.bf16.mxu0 0
  %618 = vmatpush1.bf16.msra.mxu0 0
  %619 = vmatprep.subr.bf16.mxu0 0
  %620 = vmatpush1.bf16.msra.mxu0 0
  %621 = vmatprep.subr.bf16.mxu0 0
  %622 = vmatpush1.bf16.msra.mxu0 0
  %623 = vmatprep.subr.bf16.mxu0 0
  %624 = vmatpush1.bf16.msra.mxu0 0
  %625 = vmatprep.subr.bf16.mxu0 0
  %626 = vmatpush1.bf16.msra.mxu0 0
  %627 = vmatprep.subr.bf16.mxu0 0
  %628 = vmatpush1.bf16.msra.mxu0 0
  %629 = vmatprep.subr.bf16.mxu0 0
  %630 = vmatpush1.bf16.msra.mxu0 0
  %631 = vmatprep.subr.bf16.mxu0 0
  %632 = vmatpush1.bf16.msra.mxu0 0
  %633 = vmatprep.subr.bf16.mxu0 0
  %634 = vmatpush1.bf16.msra.mxu0 0
  %635 = vmatprep.subr.bf16.mxu0 0
  %636 = vmatpush1.bf16.msra.mxu0 0
  %637 = vmatprep.subr.bf16.mxu0 0
  %638 = vmatpush1.bf16.msra.mxu0 0
  %639 = vmatprep.mubr.bf16.mxu0 0
  %640 = vmatmul.mubr.bf16.gmra.mrb[0].mxu0 %v47
  %v641 = vpop.f32.mrb[0].mxu0
  %v642 = vadd.f32 %v600, %v641
  %v643 = vpop.f32.mrb[0].mxu0
  %v644 = vpop.f32.mrb[0].mxu0
  %v645 = vadd.f32 %v600, %v644
  %v646 = vpop.f32.mrb[0].mxu0
  %647 = vdwg.mxu0
  %v648 = vmax.f32 %v642, 0.0
  %v649 = vmax.f32 %v645, 0.0
  %v650 = vpack.c.bf16 %v649, %v648
  %v657 = vunpack.c.l.b16 %v588
  %v658 = vunpack.c.l.b16 %v589
  %v659 = vunpack.c.l.b16 %v590
  %v660 = vunpack.c.l.b16 %v591
  %v661 = vunpack.c.l.b16 %v592
  %v662 = vunpack.c.l.b16 %v593
  %v663 = vpack.c.b16 %v658, %v657
  %v664 = vpack.c.b16 %v660, %v659
  %v665 = vpack.c.b16 %v662, %v661
  %v667 = vsel %vm45, %v663, 0
  %v670 = vsel %vm45, %v664, 0
  %v673 = vsel %vm45, %v665, 0
  %675 = vmatprep.subr.bf16.mxu0 0
  %676 = vmatpush1.bf16.msra.mxu0 %v650
  %677 = vmatprep.subr.bf16.mxu0 0
  %678 = vmatpush1.bf16.msra.mxu0 0
  %679 = vmatprep.subr.bf16.mxu0 0
  %680 = vmatpush1.bf16.msra.mxu0 0
  %681 = vmatprep.subr.bf16.mxu0 0
  %682 = vmatpush1.bf16.msra.mxu0 0
  %683 = vmatprep.subr.bf16.mxu0 0
  %684 = vmatpush1.bf16.msra.mxu0 0
  %685 = vmatprep.subr.bf16.mxu0 0
  %686 = vmatpush1.bf16.msra.mxu0 0
  %687 = vmatprep.subr.bf16.mxu0 0
  %688 = vmatpush1.bf16.msra.mxu0 0
  %689 = vmatprep.subr.bf16.mxu0 0
  %690 = vmatpush1.bf16.msra.mxu0 0
  %691 = vmatprep.subr.bf16.mxu0 0
  %692 = vmatpush1.bf16.msra.mxu0 0
  %693 = vmatprep.subr.bf16.mxu0 0
  %694 = vmatpush1.bf16.msra.mxu0 0
  %695 = vmatprep.subr.bf16.mxu0 0
  %696 = vmatpush1.bf16.msra.mxu0 0
  %697 = vmatprep.subr.bf16.mxu0 0
  %698 = vmatpush1.bf16.msra.mxu0 0
  %699 = vmatprep.subr.bf16.mxu0 0
  %700 = vmatpush1.bf16.msra.mxu0 0
  %701 = vmatprep.subr.bf16.mxu0 0
  %702 = vmatpush1.bf16.msra.mxu0 0
  %703 = vmatprep.subr.bf16.mxu0 0
  %704 = vmatpush1.bf16.msra.mxu0 0
  %705 = vmatprep.subr.bf16.mxu0 0
  %706 = vmatpush1.bf16.msra.mxu0 0
  %707 = vmatprep.mubr.bf16.mxu0 0
  %708 = vmatmul.mubr.bf16.gmra.mrb[0].mxu0 %v667
  %v709 = vpop.f32.mrb[0].mxu0
  %v710 = vadd.f32 0.0, %v709
  %v711 = vpop.f32.mrb[0].mxu0
  %v712 = vpop.f32.mrb[0].mxu0
  %v713 = vadd.f32 0.0, %v712
  %v714 = vpop.f32.mrb[0].mxu0
  %715 = vmatprep.mubr.bf16.mxu0 0
  %716 = vmatmul.mubr.bf16.gmra.mrb[0].mxu0 %v670
  %v717 = vpop.f32.mrb[0].mxu0
  %v718 = vadd.f32 0.0, %v717
  %v719 = vpop.f32.mrb[0].mxu0
  %v720 = vpop.f32.mrb[0].mxu0
  %v721 = vadd.f32 0.0, %v720
  %v722 = vpop.f32.mrb[0].mxu0
  %723 = vmatprep.mubr.bf16.mxu0 0
  %724 = vmatmul.mubr.bf16.gmra.mrb[0].mxu0 %v673
  %v725 = vpop.f32.mrb[0].mxu0
  %v726 = vadd.f32 0.0, %v725
  %v727 = vpop.f32.mrb[0].mxu0
  %v728 = vpop.f32.mrb[0].mxu0
  %v729 = vadd.f32 0.0, %v728
  %v730 = vpop.f32.mrb[0].mxu0
  %731 = vdwg.mxu0
  %v732 = vmul.f32 %v710, 0.5
  %v733 = vmul.f32 %v713, 0.5
  %v734 = vmul.f32 %v90, 0.5
  %v735 = vmul.f32 %v91, 0.5
  %v736 = vadd.f32 %v732, %v734
  %v737 = vadd.f32 %v733, %v735
  %v738 = vld [vmem:[%s3 + $0x98] sm:$0xf]
  %v739 = vld [vmem:[%s3 + $0x9c] sm:$0xf]
  %v740 = vld [vmem:[%s3 + $0xa0] sm:$0xf]
  %v741 = vld [vmem:[%s3 + $0xa4] sm:$0xf]
  %v742 = vld [vmem:[%s4 + $0x9] sm:$0x1]
  %v743 = vpack.c.bf16 %v737, %v736
  %v744 = vlaneseq
  %v745 = vshrl.u32 %v744, 7
  %v746 = vsub.s32 0, %v745
  %v747 = vrot.slane %v742, %v746
  %v752 = vunpack.c.l.b16 %v738
  %v753 = vunpack.c.l.b16 %v739
  %v754 = vunpack.c.l.b16 %v740
  %v755 = vunpack.c.l.b16 %v741
  %v756 = vpack.c.b16 %v753, %v752
  %v757 = vpack.c.b16 %v755, %v754
  %v761 = vsel %vm114, %v743, 0
  %763 = vmatprep.subr.bf16.mxu0 0
  %764 = vmatpush1.bf16.msra.mxu0 %v756
  %765 = vmatprep.subr.bf16.mxu0 0
  %766 = vmatpush1.bf16.msra.mxu0 %v757
  %767 = vmatprep.subr.bf16.mxu0 0
  %768 = vmatpush1.bf16.msra.mxu0 0
  %769 = vmatprep.subr.bf16.mxu0 0
  %770 = vmatpush1.bf16.msra.mxu0 0
  %771 = vmatprep.subr.bf16.mxu0 0
  %772 = vmatpush1.bf16.msra.mxu0 0
  %773 = vmatprep.subr.bf16.mxu0 0
  %774 = vmatpush1.bf16.msra.mxu0 0
  %775 = vmatprep.subr.bf16.mxu0 0
  %776 = vmatpush1.bf16.msra.mxu0 0
  %777 = vmatprep.subr.bf16.mxu0 0
  %778 = vmatpush1.bf16.msra.mxu0 0
  %779 = vmatprep.subr.bf16.mxu0 0
  %780 = vmatpush1.bf16.msra.mxu0 0
  %781 = vmatprep.subr.bf16.mxu0 0
  %782 = vmatpush1.bf16.msra.mxu0 0
  %783 = vmatprep.subr.bf16.mxu0 0
  %784 = vmatpush1.bf16.msra.mxu0 0
  %785 = vmatprep.subr.bf16.mxu0 0
  %786 = vmatpush1.bf16.msra.mxu0 0
  %787 = vmatprep.subr.bf16.mxu0 0
  %788 = vmatpush1.bf16.msra.mxu0 0
  %789 = vmatprep.subr.bf16.mxu0 0
  %790 = vmatpush1.bf16.msra.mxu0 0
  %791 = vmatprep.subr.bf16.mxu0 0
  %792 = vmatpush1.bf16.msra.mxu0 0
  %793 = vmatprep.subr.bf16.mxu0 0
  %794 = vmatpush1.bf16.msra.mxu0 0
  %795 = vmatprep.mubr.bf16.mxu0 0
  %796 = vmatmul.mubr.bf16.gmra.mrb[0].mxu0 %v761
  %v797 = vpop.f32.mrb[0].mxu0
  %v798 = vadd.f32 %v747, %v797
  %v799 = vpop.f32.mrb[0].mxu0
  %v800 = vpop.f32.mrb[0].mxu0
  %v801 = vadd.f32 %v747, %v800
  %v802 = vpop.f32.mrb[0].mxu0
  %803 = vdwg.mxu0
  %v804 = vmax.f32 %v798, 0.0
  %v805 = vmax.f32 %v801, 0.0
  %v806 = vpack.c.bf16 %v805, %v804
  %807 = vmatprep.subr.bf16.mxu0 0
  %808 = vmatpush1.bf16.msra.mxu0 %v806
  %809 = vmatprep.subr.bf16.mxu0 0
  %810 = vmatpush1.bf16.msra.mxu0 0
  %811 = vmatprep.subr.bf16.mxu0 0
  %812 = vmatpush1.bf16.msra.mxu0 0
  %813 = vmatprep.subr.bf16.mxu0 0
  %814 = vmatpush1.bf16.msra.mxu0 0
  %815 = vmatprep.subr.bf16.mxu0 0
  %816 = vmatpush1.bf16.msra.mxu0 0
  %817 = vmatprep.subr.bf16.mxu0 0
  %818 = vmatpush1.bf16.msra.mxu0 0
  %819 = vmatprep.subr.bf16.mxu0 0
  %820 = vmatpush1.bf16.msra.mxu0 0
  %821 = vmatprep.subr.bf16.mxu0 0
  %822 = vmatpush1.bf16.msra.mxu0 0
  %823 = vmatprep.subr.bf16.mxu0 0
  %824 = vmatpush1.bf16.msra.mxu0 0
  %825 = vmatprep.subr.bf16.mxu0 0
  %826 = vmatpush1.bf16.msra.mxu0 0
  %827 = vmatprep.subr.bf16.mxu0 0
  %828 = vmatpush1.bf16.msra.mxu0 0
  %829 = vmatprep.subr.bf16.mxu0 0
  %830 = vmatpush1.bf16.msra.mxu0 0
  %831 = vmatprep.subr.bf16.mxu0 0
  %832 = vmatpush1.bf16.msra.mxu0 0
  %833 = vmatprep.subr.bf16.mxu0 0
  %834 = vmatpush1.bf16.msra.mxu0 0
  %835 = vmatprep.subr.bf16.mxu0 0
  %836 = vmatpush1.bf16.msra.mxu0 0
  %837 = vmatprep.subr.bf16.mxu0 0
  %838 = vmatpush1.bf16.msra.mxu0 0
  %839 = vmatprep.mubr.bf16.mxu0 0
  %840 = vmatmul.mubr.bf16.gmra.mrb[0].mxu0 %v667
  %v841 = vpop.f32.mrb[0].mxu0
  %v842 = vadd.f32 0.0, %v841
  %v843 = vpop.f32.mrb[0].mxu0
  %v844 = vpop.f32.mrb[0].mxu0
  %v845 = vadd.f32 0.0, %v844
  %v846 = vpop.f32.mrb[0].mxu0
  %847 = vmatprep.mubr.bf16.mxu0 0
  %848 = vmatmul.mubr.bf16.gmra.mrb[0].mxu0 %v670
  %v849 = vpop.f32.mrb[0].mxu0
  %v850 = vadd.f32 0.0, %v849
  %v851 = vpop.f32.mrb[0].mxu0
  %v852 = vpop.f32.mrb[0].mxu0
  %v853 = vadd.f32 0.0, %v852
  %v854 = vpop.f32.mrb[0].mxu0
  %855 = vmatprep.mubr.bf16.mxu0 0
  %856 = vmatmul.mubr.bf16.gmra.mrb[0].mxu0 %v673
  %v857 = vpop.f32.mrb[0].mxu0
  %v858 = vadd.f32 0.0, %v857
  %v859 = vpop.f32.mrb[0].mxu0
  %v860 = vpop.f32.mrb[0].mxu0
  %v861 = vadd.f32 0.0, %v860
  %v862 = vpop.f32.mrb[0].mxu0
  %863 = vdwg.mxu0
  %v864 = vmul.f32 %v842, 0.5
  %v865 = vmul.f32 %v845, 0.5
  %v866 = vmul.f32 %v159, 0.5
  %v867 = vmul.f32 %v160, 0.5
  %v868 = vadd.f32 %v864, %v866
  %v869 = vadd.f32 %v865, %v867
  %v870 = vld [vmem:[%s3 + $0xa8] sm:$0xf]
  %v871 = vld [vmem:[%s3 + $0xac] sm:$0xf]
  %v872 = vld [vmem:[%s3 + $0xb0] sm:$0xf]
  %v873 = vld [vmem:[%s3 + $0xb4] sm:$0xf]
  %v874 = vld [vmem:[%s4 + $0xa] sm:$0x1]
  %v875 = vpack.c.bf16 %v869, %v868
  %v876 = vlaneseq
  %v877 = vshrl.u32 %v876, 7
  %v878 = vsub.s32 0, %v877
  %v879 = vrot.slane %v874, %v878
  %v884 = vunpack.c.l.b16 %v870
  %v885 = vunpack.c.l.b16 %v871
  %v886 = vunpack.c.l.b16 %v872
  %v887 = vunpack.c.l.b16 %v873
  %v888 = vpack.c.b16 %v885, %v884
  %v889 = vpack.c.b16 %v887, %v886
  %v893 = vsel %vm114, %v875, 0
  %895 = vmatprep.subr.bf16.mxu0 0
  %896 = vmatpush1.bf16.msra.mxu0 %v888
  %897 = vmatprep.subr.bf16.mxu0 0
  %898 = vmatpush1.bf16.msra.mxu0 %v889
  %899 = vmatprep.subr.bf16.mxu0 0
  %900 = vmatpush1.bf16.msra.mxu0 0
  %901 = vmatprep.subr.bf16.mxu0 0
  %902 = vmatpush1.bf16.msra.mxu0 0
  %903 = vmatprep.subr.bf16.mxu0 0
  %904 = vmatpush1.bf16.msra.mxu0 0
  %905 = vmatprep.subr.bf16.mxu0 0
  %906 = vmatpush1.bf16.msra.mxu0 0
  %907 = vmatprep.subr.bf16.mxu0 0
  %908 = vmatpush1.bf16.msra.mxu0 0
  %909 = vmatprep.subr.bf16.mxu0 0
  %910 = vmatpush1.bf16.msra.mxu0 0
  %911 = vmatprep.subr.bf16.mxu0 0
  %912 = vmatpush1.bf16.msra.mxu0 0
  %913 = vmatprep.subr.bf16.mxu0 0
  %914 = vmatpush1.bf16.msra.mxu0 0
  %915 = vmatprep.subr.bf16.mxu0 0
  %916 = vmatpush1.bf16.msra.mxu0 0
  %917 = vmatprep.subr.bf16.mxu0 0
  %918 = vmatpush1.bf16.msra.mxu0 0
  %919 = vmatprep.subr.bf16.mxu0 0
  %920 = vmatpush1.bf16.msra.mxu0 0
  %921 = vmatprep.subr.bf16.mxu0 0
  %922 = vmatpush1.bf16.msra.mxu0 0
  %923 = vmatprep.subr.bf16.mxu0 0
  %924 = vmatpush1.bf16.msra.mxu0 0
  %925 = vmatprep.subr.bf16.mxu0 0
  %926 = vmatpush1.bf16.msra.mxu0 0
  %927 = vmatprep.mubr.bf16.mxu0 0
  %928 = vmatmul.mubr.bf16.gmra.mrb[0].mxu0 %v893
  %v929 = vpop.f32.mrb[0].mxu0
  %v930 = vadd.f32 %v879, %v929
  %v931 = vpop.f32.mrb[0].mxu0
  %v932 = vpop.f32.mrb[0].mxu0
  %v933 = vadd.f32 %v879, %v932
  %v934 = vpop.f32.mrb[0].mxu0
  %935 = vdwg.mxu0
  %v936 = vmax.f32 %v930, 0.0
  %v937 = vmax.f32 %v933, 0.0
  %v938 = vpack.c.bf16 %v937, %v936
  %939 = vmatprep.subr.bf16.mxu0 0
  %940 = vmatpush1.bf16.msra.mxu0 %v938
  %941 = vmatprep.subr.bf16.mxu0 0
  %942 = vmatpush1.bf16.msra.mxu0 0
  %943 = vmatprep.subr.bf16.mxu0 0
  %944 = vmatpush1.bf16.msra.mxu0 0
  %945 = vmatprep.subr.bf16.mxu0 0
  %946 = vmatpush1.bf16.msra.mxu0 0
  %947 = vmatprep.subr.bf16.mxu0 0
  %948 = vmatpush1.bf16.msra.mxu0 0
  %949 = vmatprep.subr.bf16.mxu0 0
  %950 = vmatpush1.bf16.msra.mxu0 0
  %951 = vmatprep.subr.bf16.mxu0 0
  %952 = vmatpush1.bf16.msra.mxu0 0
  %953 = vmatprep.subr.bf16.mxu0 0
  %954 = vmatpush1.bf16.msra.mxu0 0
  %955 = vmatprep.subr.bf16.mxu0 0
  %956 = vmatpush1.bf16.msra.mxu0 0
  %957 = vmatprep.subr.bf16.mxu0 0
  %958 = vmatpush1.bf16.msra.mxu0 0
  %959 = vmatprep.subr.bf16.mxu0 0
  %960 = vmatpush1.bf16.msra.mxu0 0
  %961 = vmatprep.subr.bf16.mxu0 0
  %962 = vmatpush1.bf16.msra.mxu0 0
  %963 = vmatprep.subr.bf16.mxu0 0
  %964 = vmatpush1.bf16.msra.mxu0 0
  %965 = vmatprep.subr.bf16.mxu0 0
  %966 = vmatpush1.bf16.msra.mxu0 0
  %967 = vmatprep.subr.bf16.mxu0 0
  %968 = vmatpush1.bf16.msra.mxu0 0
  %969 = vmatprep.subr.bf16.mxu0 0
  %970 = vmatpush1.bf16.msra.mxu0 0
  %971 = vmatprep.mubr.bf16.mxu0 0
  %972 = vmatmul.mubr.bf16.gmra.mrb[0].mxu0 %v667
  %v973 = vpop.f32.mrb[0].mxu0
  %v974 = vadd.f32 0.0, %v973
  %v975 = vpop.f32.mrb[0].mxu0
  %v976 = vpop.f32.mrb[0].mxu0
  %v977 = vadd.f32 0.0, %v976
  %v978 = vpop.f32.mrb[0].mxu0
  %979 = vmatprep.mubr.bf16.mxu0 0
  %980 = vmatmul.mubr.bf16.gmra.mrb[0].mxu0 %v670
  %v981 = vpop.f32.mrb[0].mxu0
  %v982 = vadd.f32 0.0, %v981
  %v983 = vpop.f32.mrb[0].mxu0
  %v984 = vpop.f32.mrb[0].mxu0
  %v985 = vadd.f32 0.0, %v984
  %v986 = vpop.f32.mrb[0].mxu0
  %987 = vmatprep.mubr.bf16.mxu0 0
  %988 = vmatmul.mubr.bf16.gmra.mrb[0].mxu0 %v673
  %v989 = vpop.f32.mrb[0].mxu0
  %v990 = vadd.f32 0.0, %v989
  %v991 = vpop.f32.mrb[0].mxu0
  %v992 = vpop.f32.mrb[0].mxu0
  %v993 = vadd.f32 0.0, %v992
  %v994 = vpop.f32.mrb[0].mxu0
  %995 = vdwg.mxu0
  %v996 = vmul.f32 %v974, 0.5
  %v997 = vmul.f32 %v977, 0.5
  %v998 = vmul.f32 %v227, 0.5
  %v999 = vmul.f32 %v228, 0.5
  %v1000 = vadd.f32 %v996, %v998
  %v1001 = vadd.f32 %v997, %v999
  %v1002 = vld [vmem:[%s3 + $0xb8] sm:$0xf]
  %v1003 = vld [vmem:[%s3 + $0xbc] sm:$0xf]
  %v1004 = vld [vmem:[%s3 + $0xc0] sm:$0xf]
  %v1005 = vld [vmem:[%s3 + $0xc4] sm:$0xf]
  %v1006 = vld [vmem:[%s3 + $0xc8] sm:$0xf]
  %v1007 = vld [vmem:[%s3 + $0xcc] sm:$0xf]
  %v1008 = vld [vmem:[%s3 + $0xd0] sm:$0xf]
  %v1009 = vld [vmem:[%s3 + $0xd4] sm:$0xf]
  %v1010 = vld [vmem:[%s4 + $0xb] sm:$0x1]
  %v1011 = vpack.c.bf16 %v1001, %v1000
  %v1012 = vlaneseq
  %v1013 = vshrl.u32 %v1012, 7
  %v1014 = vsub.s32 0, %v1013
  %v1015 = vrot.slane %v1010, %v1014
  %v1024 = vunpack.c.l.b16 %v1002
  %v1025 = vunpack.c.l.b16 %v1003
  %v1026 = vunpack.c.l.b16 %v1004
  %v1027 = vunpack.c.l.b16 %v1005
  %v1028 = vunpack.c.l.b16 %v1006
  %v1029 = vunpack.c.l.b16 %v1007
  %v1030 = vunpack.c.l.b16 %v1008
  %v1031 = vunpack.c.l.b16 %v1009
  %v1032 = vpack.c.b16 %v1025, %v1024
  %v1033 = vpack.c.b16 %v1027, %v1026
  %v1034 = vpack.c.b16 %v1029, %v1028
  %v1035 = vpack.c.b16 %v1031, %v1030
  %v1041 = vsel %vm267, %v1011, 0
  %1043 = vmatprep.subr.bf16.mxu0 0
  %1044 = vmatpush1.bf16.msra.mxu0 %v1032
  %1045 = vmatprep.subr.bf16.mxu0 0
  %1046 = vmatpush1.bf16.msra.mxu0 %v1033
  %1047 = vmatprep.subr.bf16.mxu0 0
  %1048 = vmatpush1.bf16.msra.mxu0 %v1034
  %1049 = vmatprep.subr.bf16.mxu0 0
  %1050 = vmatpush1.bf16.msra.mxu0 %v1035
  %1051 = vmatprep.subr.bf16.mxu0 0
  %1052 = vmatpush1.bf16.msra.mxu0 0
  %1053 = vmatprep.subr.bf16.mxu0 0
  %1054 = vmatpush1.bf16.msra.mxu0 0
  %1055 = vmatprep.subr.bf16.mxu0 0
  %1056 = vmatpush1.bf16.msra.mxu0 0
  %1057 = vmatprep.subr.bf16.mxu0 0
  %1058 = vmatpush1.bf16.msra.mxu0 0
  %1059 = vmatprep.subr.bf16.mxu0 0
  %1060 = vmatpush1.bf16.msra.mxu0 0
  %1061 = vmatprep.subr.bf16.mxu0 0
  %1062 = vmatpush1.bf16.msra.mxu0 0
  %1063 = vmatprep.subr.bf16.mxu0 0
  %1064 = vmatpush1.bf16.msra.mxu0 0
  %1065 = vmatprep.subr.bf16.mxu0 0
  %1066 = vmatpush1.bf16.msra.mxu0 0
  %1067 = vmatprep.subr.bf16.mxu0 0
  %1068 = vmatpush1.bf16.msra.mxu0 0
  %1069 = vmatprep.subr.bf16.mxu0 0
  %1070 = vmatpush1.bf16.msra.mxu0 0
  %1071 = vmatprep.subr.bf16.mxu0 0
  %1072 = vmatpush1.bf16.msra.mxu0 0
  %1073 = vmatprep.subr.bf16.mxu0 0
  %1074 = vmatpush1.bf16.msra.mxu0 0
  %1075 = vmatprep.mubr.bf16.mxu0 0
  %1076 = vmatmul.mubr.bf16.gmra.mrb[0].mxu0 %v1041
  %v1077 = vpop.f32.mrb[0].mxu0
  %v1078 = vadd.f32 %v1015, %v1077
  %v1079 = vpop.f32.mrb[0].mxu0
  %v1080 = vpop.f32.mrb[0].mxu0
  %v1081 = vadd.f32 %v1015, %v1080
  %v1082 = vpop.f32.mrb[0].mxu0
  %1083 = vdwg.mxu0
  %v1084 = vmax.f32 %v1078, 0.0
  %v1085 = vmax.f32 %v1081, 0.0
  %v1086 = vpack.c.bf16 %v1085, %v1084
  %1087 = vmatprep.subr.bf16.mxu0 0
  %1088 = vmatpush1.bf16.msra.mxu0 %v1086
  %1089 = vmatprep.subr.bf16.mxu0 0
  %1090 = vmatpush1.bf16.msra.mxu0 0
  %1091 = vmatprep.subr.bf16.mxu0 0
  %1092 = vmatpush1.bf16.msra.mxu0 0
  %1093 = vmatprep.subr.bf16.mxu0 0
  %1094 = vmatpush1.bf16.msra.mxu0 0
  %1095 = vmatprep.subr.bf16.mxu0 0
  %1096 = vmatpush1.bf16.msra.mxu0 0
  %1097 = vmatprep.subr.bf16.mxu0 0
  %1098 = vmatpush1.bf16.msra.mxu0 0
  %1099 = vmatprep.subr.bf16.mxu0 0
  %1100 = vmatpush1.bf16.msra.mxu0 0
  %1101 = vmatprep.subr.bf16.mxu0 0
  %1102 = vmatpush1.bf16.msra.mxu0 0
  %1103 = vmatprep.subr.bf16.mxu0 0
  %1104 = vmatpush1.bf16.msra.mxu0 0
  %1105 = vmatprep.subr.bf16.mxu0 0
  %1106 = vmatpush1.bf16.msra.mxu0 0
  %1107 = vmatprep.subr.bf16.mxu0 0
  %1108 = vmatpush1.bf16.msra.mxu0 0
  %1109 = vmatprep.subr.bf16.mxu0 0
  %1110 = vmatpush1.bf16.msra.mxu0 0
  %1111 = vmatprep.subr.bf16.mxu0 0
  %1112 = vmatpush1.bf16.msra.mxu0 0
  %1113 = vmatprep.subr.bf16.mxu0 0
  %1114 = vmatpush1.bf16.msra.mxu0 0
  %1115 = vmatprep.subr.bf16.mxu0 0
  %1116 = vmatpush1.bf16.msra.mxu0 0
  %1117 = vmatprep.subr.bf16.mxu0 0
  %1118 = vmatpush1.bf16.msra.mxu0 0
  %1119 = vmatprep.mubr.bf16.mxu0 0
  %1120 = vmatmul.mubr.bf16.gmra.mrb[0].mxu0 %v667
  %v1121 = vpop.f32.mrb[0].mxu0
  %v1122 = vadd.f32 0.0, %v1121
  %v1123 = vpop.f32.mrb[0].mxu0
  %v1124 = vpop.f32.mrb[0].mxu0
  %v1125 = vadd.f32 0.0, %v1124
  %v1126 = vpop.f32.mrb[0].mxu0
  %1127 = vmatprep.mubr.bf16.mxu0 0
  %1128 = vmatmul.mubr.bf16.gmra.mrb[0].mxu0 %v670
  %v1129 = vpop.f32.mrb[0].mxu0
  %v1130 = vadd.f32 0.0, %v1129
  %v1131 = vpop.f32.mrb[0].mxu0
  %v1132 = vpop.f32.mrb[0].mxu0
  %v1133 = vadd.f32 0.0, %v1132
  %v1134 = vpop.f32.mrb[0].mxu0
  %1135 = vmatprep.mubr.bf16.mxu0 0
  %1136 = vmatmul.mubr.bf16.gmra.mrb[0].mxu0 %v673
  %v1137 = vpop.f32.mrb[0].mxu0
  %v1138 = vadd.f32 0.0, %v1137
  %v1139 = vpop.f32.mrb[0].mxu0
  %v1140 = vpop.f32.mrb[0].mxu0
  %v1141 = vadd.f32 0.0, %v1140
  %v1142 = vpop.f32.mrb[0].mxu0
  %1143 = vdwg.mxu0
  %v1144 = vmul.f32 %v1122, 0.5
  %v1145 = vmul.f32 %v1125, 0.5
  %v1146 = vmul.f32 %v306, 0.5
  %v1147 = vmul.f32 %v309, 0.5
  %v1148 = vadd.f32 %v1144, %v1146
  %v1149 = vadd.f32 %v1145, %v1147
  %v1150 = vld [vmem:[%s3 + $0xd8] sm:$0xf]
  %v1151 = vld [vmem:[%s4 + $0xc] sm:$0x1]
  %v1152 = vpack.c.bf16 %v1149, %v1148
  %v1153 = vlaneseq
  %v1154 = vshrl.u32 %v1153, 7
  %v1155 = vsub.s32 0, %v1154
  %v1156 = vrot.slane %v1151, %v1155
  %v1158 = vsel %vm319, %v1152, 0
  %v1161 = vsel %vm323, %v1150, 0
  %1163 = vmatprep.subr.bf16.mxu0 0
  %1164 = vmatpush1.bf16.msra.mxu0 %v1161
  %1165 = vmatprep.subr.bf16.mxu0 0
  %1166 = vmatpush1.bf16.msra.mxu0 0
  %1167 = vmatprep.subr.bf16.mxu0 0
  %1168 = vmatpush1.bf16.msra.mxu0 0
  %1169 = vmatprep.subr.bf16.mxu0 0
  %1170 = vmatpush1.bf16.msra.mxu0 0
  %1171 = vmatprep.subr.bf16.mxu0 0
  %1172 = vmatpush1.bf16.msra.mxu0 0
  %1173 = vmatprep.subr.bf16.mxu0 0
  %1174 = vmatpush1.bf16.msra.mxu0 0
  %1175 = vmatprep.subr.bf16.mxu0 0
  %1176 = vmatpush1.bf16.msra.mxu0 0
  %1177 = vmatprep.subr.bf16.mxu0 0
  %1178 = vmatpush1.bf16.msra.mxu0 0
  %1179 = vmatprep.subr.bf16.mxu0 0
  %1180 = vmatpush1.bf16.msra.mxu0 0
  %1181 = vmatprep.subr.bf16.mxu0 0
  %1182 = vmatpush1.bf16.msra.mxu0 0
  %1183 = vmatprep.subr.bf16.mxu0 0
  %1184 = vmatpush1.bf16.msra.mxu0 0
  %1185 = vmatprep.subr.bf16.mxu0 0
  %1186 = vmatpush1.bf16.msra.mxu0 0
  %1187 = vmatprep.subr.bf16.mxu0 0
  %1188 = vmatpush1.bf16.msra.mxu0 0
  %1189 = vmatprep.subr.bf16.mxu0 0
  %1190 = vmatpush1.bf16.msra.mxu0 0
  %1191 = vmatprep.subr.bf16.mxu0 0
  %1192 = vmatpush1.bf16.msra.mxu0 0
  %1193 = vmatprep.subr.bf16.mxu0 0
  %1194 = vmatpush1.bf16.msra.mxu0 0
  %1195 = vmatprep.mubr.bf16.mxu0 0
  %1196 = vmatmul.mubr.bf16.gmra.mrb[0].mxu0 %v1158
  %v1197 = vpop.f32.mrb[0].mxu0
  %v1198 = vadd.f32 %v1156, %v1197
  %v1199 = vpop.f32.mrb[0].mxu0
  %v1200 = vpop.f32.mrb[0].mxu0
  %v1201 = vadd.f32 %v1156, %v1200
  %v1202 = vpop.f32.mrb[0].mxu0
  %1203 = vdwg.mxu0
  %v1204 = vpack.c.bf16 %v1201, %v1198
  %1205 = vmatprep.subr.bf16.mxu0 0
  %1206 = vmatpush1.bf16.msra.mxu0 %v1204
  %1207 = vmatprep.subr.bf16.mxu0 0
  %1208 = vmatpush1.bf16.msra.mxu0 0
  %1209 = vmatprep.subr.bf16.mxu0 0
  %1210 = vmatpush1.bf16.msra.mxu0 0
  %1211 = vmatprep.subr.bf16.mxu0 0
  %1212 = vmatpush1.bf16.msra.mxu0 0
  %1213 = vmatprep.subr.bf16.mxu0 0
  %1214 = vmatpush1.bf16.msra.mxu0 0
  %1215 = vmatprep.subr.bf16.mxu0 0
  %1216 = vmatpush1.bf16.msra.mxu0 0
  %1217 = vmatprep.subr.bf16.mxu0 0
  %1218 = vmatpush1.bf16.msra.mxu0 0
  %1219 = vmatprep.subr.bf16.mxu0 0
  %1220 = vmatpush1.bf16.msra.mxu0 0
  %1221 = vmatprep.subr.bf16.mxu0 0
  %1222 = vmatpush1.bf16.msra.mxu0 0
  %1223 = vmatprep.subr.bf16.mxu0 0
  %1224 = vmatpush1.bf16.msra.mxu0 0
  %1225 = vmatprep.subr.bf16.mxu0 0
  %1226 = vmatpush1.bf16.msra.mxu0 0
  %1227 = vmatprep.subr.bf16.mxu0 0
  %1228 = vmatpush1.bf16.msra.mxu0 0
  %1229 = vmatprep.subr.bf16.mxu0 0
  %1230 = vmatpush1.bf16.msra.mxu0 0
  %1231 = vmatprep.subr.bf16.mxu0 0
  %1232 = vmatpush1.bf16.msra.mxu0 0
  %1233 = vmatprep.subr.bf16.mxu0 0
  %1234 = vmatpush1.bf16.msra.mxu0 0
  %1235 = vmatprep.subr.bf16.mxu0 0
  %1236 = vmatpush1.bf16.msra.mxu0 0
  %1237 = vmatprep.mubr.bf16.mxu0 0
  %1238 = vmatmul.mubr.bf16.gmra.mrb[0].mxu0 %v667
  %v1239 = vpop.f32.mrb[0].mxu0
  %v1240 = vadd.f32 0.0, %v1239
  %v1241 = vpop.f32.mrb[0].mxu0
  %v1242 = vpop.f32.mrb[0].mxu0
  %v1243 = vadd.f32 0.0, %v1242
  %v1244 = vpop.f32.mrb[0].mxu0
  %1245 = vmatprep.mubr.bf16.mxu0 0
  %1246 = vmatmul.mubr.bf16.gmra.mrb[0].mxu0 %v670
  %v1247 = vpop.f32.mrb[0].mxu0
  %v1248 = vadd.f32 0.0, %v1247
  %v1249 = vpop.f32.mrb[0].mxu0
  %v1250 = vpop.f32.mrb[0].mxu0
  %v1251 = vadd.f32 0.0, %v1250
  %v1252 = vpop.f32.mrb[0].mxu0
  %1253 = vmatprep.mubr.bf16.mxu0 0
  %1254 = vmatmul.mubr.bf16.gmra.mrb[0].mxu0 %v673
  %v1255 = vpop.f32.mrb[0].mxu0
  %v1256 = vadd.f32 0.0, %v1255
  %v1257 = vpop.f32.mrb[0].mxu0
  %v1258 = vpop.f32.mrb[0].mxu0
  %v1259 = vadd.f32 0.0, %v1258
  %v1260 = vpop.f32.mrb[0].mxu0
  %1261 = vdwg.mxu0
  %vm1262 = vcmask 31744
  %v1263 = vsel %vm1262, %v1240, -inf
  %1264 = vmax.xlane.f32.xlu0 %v1263
  %v1265 = vpop.xlane.xlu0 %1264
  %v1266 = vsel %vm1262, %v1243, -inf
  %1267 = vmax.xlane.f32.xlu0 %v1266
  %v1268 = vpop.xlane.xlu0 %1267
  %v1269 = vsub.f32 %v1240, %v1265
  %v1270 = vsub.f32 %v1243, %v1268
  %v1271 = vmul.f32 %v1269, 1.442695
  %v1272 = vpow.pop %v1271
  %v1273 = vmul.f32 %v1270, 1.442695
  %v1274 = vpow.pop %v1273
  %v1275 = vsel %vm1262, %v1272, 0.0
  %1276 = vadd.xlane.f32.xlu0 %v1275
  %v1277 = vpop.xlane.xlu0 %1276
  %v1278 = vsel %vm1262, %v1274, 0.0
  %1279 = vadd.xlane.f32.xlu0 %v1278
  %v1280 = vpop.xlane.xlu0 %1279
  %v1281 = vrcp.pop %v1277
  %v1282 = vmul.f32 %v1272, %v1281
  %v1283 = vrcp.pop %v1280
  %v1284 = vmul.f32 %v1274, %v1283
  %v1285 = vld [vmem:[%s6] sm:$0xff]
  %v1286 = vmul.f32 %v306, %v306
  %v1287 = vmul.f32 %v309, %v309
  %v1288 = vsel %vm319, %v1286, 0.0
  %1289 = vadd.xlane.f32.xlu0 %v1288
  %v1290 = vpop.xlane.xlu0 %1289
  %v1291 = vsel %vm319, %v1287, 0.0
  %1292 = vadd.xlane.f32.xlu0 %v1291
  %v1293 = vpop.xlane.xlu0 %1292
  %v1294 = vmul.f32 %v1285, %v1285
  %v1295 = vsel %vm1262, %v1294, 0.0
  %v1296 = vrot.slane %v1295, 4
  %v1297 = vadd.f32 %v1295, %v1296
  %v1298 = vrot.slane %v1297, 2
  %v1299 = vadd.f32 %v1297, %v1298
  %v1300 = vrot.slane %v1299, 1
  %v1301 = vadd.f32 %v1299, %v1300
  %v1302 = vadd.f32 %v1290, %v1301
  %v1303 = vadd.f32 %v1293, %v1301
  %v1305 = vsel %vm319, %v306, 0
  %v1308 = vsel %vm319, %v309, 0
  %1310 = vmatprep.subr.mxu0 0.0
  %1311 = vmatpush1.msra.mxu0 %v1285
  %1312 = vmatprep.subr.mxu0 0.0
  %1313 = vmatpush1.msra.mxu0 0.0
  %1314 = vmatprep.subr.mxu0 0.0
  %1315 = vmatpush1.msra.mxu0 0.0
  %1316 = vmatprep.subr.mxu0 0.0
  %1317 = vmatpush1.msra.mxu0 0.0
  %1318 = vmatprep.subr.mxu0 0.0
  %1319 = vmatpush1.msra.mxu0 0.0
  %1320 = vmatprep.subr.mxu0 0.0
  %1321 = vmatpush1.msra.mxu0 0.0
  %1322 = vmatprep.subr.mxu0 0.0
  %1323 = vmatpush1.msra.mxu0 0.0
  %1324 = vmatprep.subr.mxu0 0.0
  %1325 = vmatpush1.msra.mxu0 0.0
  %1326 = vmatprep.subr.mxu0 0.0
  %1327 = vmatpush1.msra.mxu0 0.0
  %1328 = vmatprep.subr.mxu0 0.0
  %1329 = vmatpush1.msra.mxu0 0.0
  %1330 = vmatprep.subr.mxu0 0.0
  %1331 = vmatpush1.msra.mxu0 0.0
  %1332 = vmatprep.subr.mxu0 0.0
  %1333 = vmatpush1.msra.mxu0 0.0
  %1334 = vmatprep.subr.mxu0 0.0
  %1335 = vmatpush1.msra.mxu0 0.0
  %1336 = vmatprep.subr.mxu0 0.0
  %1337 = vmatpush1.msra.mxu0 0.0
  %1338 = vmatprep.subr.mxu0 0.0
  %1339 = vmatpush1.msra.mxu0 0.0
  %1340 = vmatprep.subr.mxu0 0.0
  %1341 = vmatpush1.msra.mxu0 0.0
  %1342 = vmatprep.subr.mxu0 0.0
  %1343 = vmatpush1.msra.mxu0 0.0
  %1344 = vmatprep.subr.mxu0 0.0
  %1345 = vmatpush1.msra.mxu0 0.0
  %1346 = vmatprep.subr.mxu0 0.0
  %1347 = vmatpush1.msra.mxu0 0.0
  %1348 = vmatprep.subr.mxu0 0.0
  %1349 = vmatpush1.msra.mxu0 0.0
  %1350 = vmatprep.subr.mxu0 0.0
  %1351 = vmatpush1.msra.mxu0 0.0
  %1352 = vmatprep.subr.mxu0 0.0
  %1353 = vmatpush1.msra.mxu0 0.0
  %1354 = vmatprep.subr.mxu0 0.0
  %1355 = vmatpush1.msra.mxu0 0.0
  %1356 = vmatprep.subr.mxu0 0.0
  %1357 = vmatpush1.msra.mxu0 0.0
  %1358 = vmatprep.subr.mxu0 0.0
  %1359 = vmatpush1.msra.mxu0 0.0
  %1360 = vmatprep.subr.mxu0 0.0
  %1361 = vmatpush1.msra.mxu0 0.0
  %1362 = vmatprep.subr.mxu0 0.0
  %1363 = vmatpush1.msra.mxu0 0.0
  %1364 = vmatprep.subr.mxu0 0.0
  %1365 = vmatpush1.msra.mxu0 0.0
  %1366 = vmatprep.subr.mxu0 0.0
  %1367 = vmatpush1.msra.mxu0 0.0
  %1368 = vmatprep.subr.mxu0 0.0
  %1369 = vmatpush1.msra.mxu0 0.0
  %1370 = vmatprep.subr.mxu0 0.0
  %1371 = vmatpush1.msra.mxu0 0.0
  %1372 = vmatprep.subr.mxu0 0.0
  %1373 = vmatpush1.msra.mxu0 0.0
  %1374 = vmatprep.mubr.f32.mxu0 0.0
  %1375 = vmatmul.mubr.f32.gmra.mrb[0].mxu0 %v1305
  %v1376 = vpop.f32.mrb[0].mxu0
  %v1377 = vadd.f32 0.0, %v1376
  %v1378 = vpop.f32.mrb[0].mxu0
  %1379 = vmatprep.mubr.f32.mxu0 0.0
  %1380 = vmatmul.mubr.f32.gmra.mrb[0].mxu0 %v1308
  %v1381 = vpop.f32.mrb[0].mxu0
  %v1382 = vadd.f32 0.0, %v1381
  %v1383 = vpop.f32.mrb[0].mxu0
  %1384 = vdwg.mxu0
  %v1385 = vmul.f32 %v1377, 2.0
  %v1386 = vmul.f32 %v1382, 2.0
  %v1387 = vsub.f32 %v1302, %v1385
  %v1388 = vsub.f32 %v1303, %v1386
  %v1389 = vmax.f32 %v1387, 0.0
  %v1390 = vmax.f32 %v1388, 0.0
  %v1391 = vadd.f32 %v1389, 1.0
  %v1392 = vadd.f32 %v1390, 1.0
  %v1393 = vrcp.pop %v1391
  %v1394 = vmul.f32 1.0, %v1393
  %v1395 = vrcp.pop %v1392
  %v1396 = vmul.f32 1.0, %v1395
  %v1397 = vsel %vm1262, %v1394, 0.0
  %1398 = vadd.xlane.f32.xlu0 %v1397
  %v1399 = vpop.xlane.xlu0 %1398
  %v1400 = vsel %vm1262, %v1396, 0.0
  %1401 = vadd.xlane.f32.xlu0 %v1400
  %v1402 = vpop.xlane.xlu0 %1401
  %v1403 = vrcp.pop %v1399
  %v1404 = vmul.f32 %v1394, %v1403
  %v1405 = vrcp.pop %v1402
  %v1406 = vmul.f32 %v1396, %v1405
  %v1407 = vld [vmem:[%s2] sm:$0xff]
  %v1408 = vld [vmem:[%s2 + $0x8] sm:$0xff]
  %v1409 = vld [vmem:[%s2 + $0x10] sm:$0xff]
  %v1410 = vld [vmem:[%s2 + $0x18] sm:$0xff]
  %v1411 = vld [vmem:[%s2 + $0x20] sm:$0xff]
  %v1412 = vld [vmem:[%s2 + $0x28] sm:$0xff]
  %v1413 = vld [vmem:[%s2 + $0x30] sm:$0xff]
  %v1414 = vld [vmem:[%s2 + $0x38] sm:$0xff]
  %v1416 = vsel %vm45, %v1407, 0
  %v1419 = vsel %vm45, %v1408, 0
  %v1422 = vsel %vm45, %v1409, 0
  %v1425 = vsel %vm45, %v1410, 0
  %v1428 = vsel %vm45, %v1411, 0
  %v1431 = vsel %vm45, %v1412, 0
  %v1434 = vsel %vm45, %v1413, 0
  %v1437 = vsel %vm45, %v1414, 0
  %1439 = vmatprep.subr.mxu0 0.0
  %1440 = vmatpush1.msra.mxu0 %v306
  %1441 = vmatprep.subr.mxu0 0.0
  %1442 = vmatpush1.msra.mxu0 %v309
  %1443 = vmatprep.subr.mxu0 0.0
  %1444 = vmatpush1.msra.mxu0 0.0
  %1445 = vmatprep.subr.mxu0 0.0
  %1446 = vmatpush1.msra.mxu0 0.0
  %1447 = vmatprep.subr.mxu0 0.0
  %1448 = vmatpush1.msra.mxu0 0.0
  %1449 = vmatprep.subr.mxu0 0.0
  %1450 = vmatpush1.msra.mxu0 0.0
  %1451 = vmatprep.subr.mxu0 0.0
  %1452 = vmatpush1.msra.mxu0 0.0
  %1453 = vmatprep.subr.mxu0 0.0
  %1454 = vmatpush1.msra.mxu0 0.0
  %1455 = vmatprep.subr.mxu0 0.0
  %1456 = vmatpush1.msra.mxu0 0.0
  %1457 = vmatprep.subr.mxu0 0.0
  %1458 = vmatpush1.msra.mxu0 0.0
  %1459 = vmatprep.subr.mxu0 0.0
  %1460 = vmatpush1.msra.mxu0 0.0
  %1461 = vmatprep.subr.mxu0 0.0
  %1462 = vmatpush1.msra.mxu0 0.0
  %1463 = vmatprep.subr.mxu0 0.0
  %1464 = vmatpush1.msra.mxu0 0.0
  %1465 = vmatprep.subr.mxu0 0.0
  %1466 = vmatpush1.msra.mxu0 0.0
  %1467 = vmatprep.subr.mxu0 0.0
  %1468 = vmatpush1.msra.mxu0 0.0
  %1469 = vmatprep.subr.mxu0 0.0
  %1470 = vmatpush1.msra.mxu0 0.0
  %1471 = vmatprep.subr.mxu0 0.0
  %1472 = vmatpush1.msra.mxu0 0.0
  %1473 = vmatprep.subr.mxu0 0.0
  %1474 = vmatpush1.msra.mxu0 0.0
  %1475 = vmatprep.subr.mxu0 0.0
  %1476 = vmatpush1.msra.mxu0 0.0
  %1477 = vmatprep.subr.mxu0 0.0
  %1478 = vmatpush1.msra.mxu0 0.0
  %1479 = vmatprep.subr.mxu0 0.0
  %1480 = vmatpush1.msra.mxu0 0.0
  %1481 = vmatprep.subr.mxu0 0.0
  %1482 = vmatpush1.msra.mxu0 0.0
  %1483 = vmatprep.subr.mxu0 0.0
  %1484 = vmatpush1.msra.mxu0 0.0
  %1485 = vmatprep.subr.mxu0 0.0
  %1486 = vmatpush1.msra.mxu0 0.0
  %1487 = vmatprep.subr.mxu0 0.0
  %1488 = vmatpush1.msra.mxu0 0.0
  %1489 = vmatprep.subr.mxu0 0.0
  %1490 = vmatpush1.msra.mxu0 0.0
  %1491 = vmatprep.subr.mxu0 0.0
  %1492 = vmatpush1.msra.mxu0 0.0
  %1493 = vmatprep.subr.mxu0 0.0
  %1494 = vmatpush1.msra.mxu0 0.0
  %1495 = vmatprep.subr.mxu0 0.0
  %1496 = vmatpush1.msra.mxu0 0.0
  %1497 = vmatprep.subr.mxu0 0.0
  %1498 = vmatpush1.msra.mxu0 0.0
  %1499 = vmatprep.subr.mxu0 0.0
  %1500 = vmatpush1.msra.mxu0 0.0
  %1501 = vmatprep.subr.mxu0 0.0
  %1502 = vmatpush1.msra.mxu0 0.0
  %1503 = vmatprep.mubr.f32.mxu0 0.0
  %1504 = vmatmul.mubr.f32.gmra.mrb[0].mxu0 %v1416
  %v1505 = vpop.f32.mrb[0].mxu0
  %v1506 = vadd.f32 0.0, %v1505
  %v1507 = vpop.f32.mrb[0].mxu0
  %1508 = vmatprep.mubr.f32.mxu0 0.0
  %1509 = vmatmul.mubr.f32.gmra.mrb[0].mxu0 %v1419
  %v1510 = vpop.f32.mrb[0].mxu0
  %v1511 = vadd.f32 0.0, %v1510
  %v1512 = vpop.f32.mrb[0].mxu0
  %1513 = vmatprep.mubr.f32.mxu0 0.0
  %1514 = vmatmul.mubr.f32.gmra.mrb[0].mxu0 %v1422
  %v1515 = vpop.f32.mrb[0].mxu0
  %v1516 = vadd.f32 0.0, %v1515
  %v1517 = vpop.f32.mrb[0].mxu0
  %1518 = vmatprep.mubr.f32.mxu0 0.0
  %1519 = vmatmul.mubr.f32.gmra.mrb[0].mxu0 %v1425
  %v1520 = vpop.f32.mrb[0].mxu0
  %v1521 = vadd.f32 0.0, %v1520
  %v1522 = vpop.f32.mrb[0].mxu0
  %1523 = vmatprep.mubr.f32.mxu0 0.0
  %1524 = vmatmul.mubr.f32.gmra.mrb[0].mxu0 %v1428
  %v1525 = vpop.f32.mrb[0].mxu0
  %v1526 = vadd.f32 0.0, %v1525
  %v1527 = vpop.f32.mrb[0].mxu0
  %1528 = vmatprep.mubr.f32.mxu0 0.0
  %1529 = vmatmul.mubr.f32.gmra.mrb[0].mxu0 %v1431
  %v1530 = vpop.f32.mrb[0].mxu0
  %v1531 = vadd.f32 0.0, %v1530
  %v1532 = vpop.f32.mrb[0].mxu0
  %1533 = vmatprep.mubr.f32.mxu0 0.0
  %1534 = vmatmul.mubr.f32.gmra.mrb[0].mxu0 %v1434
  %v1535 = vpop.f32.mrb[0].mxu0
  %v1536 = vadd.f32 0.0, %v1535
  %v1537 = vpop.f32.mrb[0].mxu0
  %1538 = vmatprep.mubr.f32.mxu0 0.0
  %1539 = vmatmul.mubr.f32.gmra.mrb[0].mxu0 %v1437
  %v1540 = vpop.f32.mrb[0].mxu0
  %v1541 = vadd.f32 0.0, %v1540
  %v1542 = vpop.f32.mrb[0].mxu0
  %1543 = vdwg.mxu0
  %v1544 = vld [vmem:[%s5] sm:$0xff]
  %v1545 = vld [vmem:[%s5 + $0x8] sm:$0xff]
  %v1547 = vsel %vm319, %v1526, 0
  %v1550 = vsel %vm319, %v1531, 0
  %v1553 = vsel %vm319, %v1536, 0
  %v1556 = vsel %vm319, %v1541, 0
  %1558 = vmatprep.subr.mxu0 0.0
  %1559 = vmatpush1.msra.mxu0 %v1545
  %1560 = vmatprep.subr.mxu0 0.0
  %1561 = vmatpush1.msra.mxu0 0.0
  %1562 = vmatprep.subr.mxu0 0.0
  %1563 = vmatpush1.msra.mxu0 0.0
  %1564 = vmatprep.subr.mxu0 0.0
  %1565 = vmatpush1.msra.mxu0 0.0
  %1566 = vmatprep.subr.mxu0 0.0
  %1567 = vmatpush1.msra.mxu0 0.0
  %1568 = vmatprep.subr.mxu0 0.0
  %1569 = vmatpush1.msra.mxu0 0.0
  %1570 = vmatprep.subr.mxu0 0.0
  %1571 = vmatpush1.msra.mxu0 0.0
  %1572 = vmatprep.subr.mxu0 0.0
  %1573 = vmatpush1.msra.mxu0 0.0
  %1574 = vmatprep.subr.mxu0 0.0
  %1575 = vmatpush1.msra.mxu0 0.0
  %1576 = vmatprep.subr.mxu0 0.0
  %1577 = vmatpush1.msra.mxu0 0.0
  %1578 = vmatprep.subr.mxu0 0.0
  %1579 = vmatpush1.msra.mxu0 0.0
  %1580 = vmatprep.subr.mxu0 0.0
  %1581 = vmatpush1.msra.mxu0 0.0
  %1582 = vmatprep.subr.mxu0 0.0
  %1583 = vmatpush1.msra.mxu0 0.0
  %1584 = vmatprep.subr.mxu0 0.0
  %1585 = vmatpush1.msra.mxu0 0.0
  %1586 = vmatprep.subr.mxu0 0.0
  %1587 = vmatpush1.msra.mxu0 0.0
  %1588 = vmatprep.subr.mxu0 0.0
  %1589 = vmatpush1.msra.mxu0 0.0
  %1590 = vmatprep.subr.mxu0 0.0
  %1591 = vmatpush1.msra.mxu0 0.0
  %1592 = vmatprep.subr.mxu0 0.0
  %1593 = vmatpush1.msra.mxu0 0.0
  %1594 = vmatprep.subr.mxu0 0.0
  %1595 = vmatpush1.msra.mxu0 0.0
  %1596 = vmatprep.subr.mxu0 0.0
  %1597 = vmatpush1.msra.mxu0 0.0
  %1598 = vmatprep.subr.mxu0 0.0
  %1599 = vmatpush1.msra.mxu0 0.0
  %1600 = vmatprep.subr.mxu0 0.0
  %1601 = vmatpush1.msra.mxu0 0.0
  %1602 = vmatprep.subr.mxu0 0.0
  %1603 = vmatpush1.msra.mxu0 0.0
  %1604 = vmatprep.subr.mxu0 0.0
  %1605 = vmatpush1.msra.mxu0 0.0
  %1606 = vmatprep.subr.mxu0 0.0
  %1607 = vmatpush1.msra.mxu0 0.0
  %1608 = vmatprep.subr.mxu0 0.0
  %1609 = vmatpush1.msra.mxu0 0.0
  %1610 = vmatprep.subr.mxu0 0.0
  %1611 = vmatpush1.msra.mxu0 0.0
  %1612 = vmatprep.subr.mxu0 0.0
  %1613 = vmatpush1.msra.mxu0 0.0
  %1614 = vmatprep.subr.mxu0 0.0
  %1615 = vmatpush1.msra.mxu0 0.0
  %1616 = vmatprep.subr.mxu0 0.0
  %1617 = vmatpush1.msra.mxu0 0.0
  %1618 = vmatprep.subr.mxu0 0.0
  %1619 = vmatpush1.msra.mxu0 0.0
  %1620 = vmatprep.subr.mxu0 0.0
  %1621 = vmatpush1.msra.mxu0 0.0
  %1622 = vmatprep.mubr.f32.mxu0 0.0
  %1623 = vmatmul.mubr.f32.gmra.mrb[0].mxu0 %v1547
  %v1624 = vpop.f32.mrb[0].mxu0
  %v1625 = vadd.f32 0.0, %v1624
  %v1626 = vpop.f32.mrb[0].mxu0
  %1627 = vmatprep.mubr.f32.mxu0 0.0
  %1628 = vmatmul.mubr.f32.gmra.mrb[0].mxu0 %v1550
  %v1629 = vpop.f32.mrb[0].mxu0
  %v1630 = vadd.f32 0.0, %v1629
  %v1631 = vpop.f32.mrb[0].mxu0
  %1632 = vmatprep.mubr.f32.mxu0 0.0
  %1633 = vmatmul.mubr.f32.gmra.mrb[0].mxu0 %v1553
  %v1634 = vpop.f32.mrb[0].mxu0
  %v1635 = vadd.f32 0.0, %v1634
  %v1636 = vpop.f32.mrb[0].mxu0
  %1637 = vmatprep.mubr.f32.mxu0 0.0
  %1638 = vmatmul.mubr.f32.gmra.mrb[0].mxu0 %v1556
  %v1639 = vpop.f32.mrb[0].mxu0
  %v1640 = vadd.f32 0.0, %v1639
  %v1641 = vpop.f32.mrb[0].mxu0
  %1642 = vdwg.mxu0
  %v1644 = vsel %vm319, %v1506, 0
  %v1647 = vsel %vm319, %v1511, 0
  %v1650 = vsel %vm319, %v1516, 0
  %v1653 = vsel %vm319, %v1521, 0
  %1655 = vmatprep.subr.mxu0 0.0
  %1656 = vmatpush1.msra.mxu0 %v1544
  %1657 = vmatprep.subr.mxu0 0.0
  %1658 = vmatpush1.msra.mxu0 0.0
  %1659 = vmatprep.subr.mxu0 0.0
  %1660 = vmatpush1.msra.mxu0 0.0
  %1661 = vmatprep.subr.mxu0 0.0
  %1662 = vmatpush1.msra.mxu0 0.0
  %1663 = vmatprep.subr.mxu0 0.0
  %1664 = vmatpush1.msra.mxu0 0.0
  %1665 = vmatprep.subr.mxu0 0.0
  %1666 = vmatpush1.msra.mxu0 0.0
  %1667 = vmatprep.subr.mxu0 0.0
  %1668 = vmatpush1.msra.mxu0 0.0
  %1669 = vmatprep.subr.mxu0 0.0
  %1670 = vmatpush1.msra.mxu0 0.0
  %1671 = vmatprep.subr.mxu0 0.0
  %1672 = vmatpush1.msra.mxu0 0.0
  %1673 = vmatprep.subr.mxu0 0.0
  %1674 = vmatpush1.msra.mxu0 0.0
  %1675 = vmatprep.subr.mxu0 0.0
  %1676 = vmatpush1.msra.mxu0 0.0
  %1677 = vmatprep.subr.mxu0 0.0
  %1678 = vmatpush1.msra.mxu0 0.0
  %1679 = vmatprep.subr.mxu0 0.0
  %1680 = vmatpush1.msra.mxu0 0.0
  %1681 = vmatprep.subr.mxu0 0.0
  %1682 = vmatpush1.msra.mxu0 0.0
  %1683 = vmatprep.subr.mxu0 0.0
  %1684 = vmatpush1.msra.mxu0 0.0
  %1685 = vmatprep.subr.mxu0 0.0
  %1686 = vmatpush1.msra.mxu0 0.0
  %1687 = vmatprep.subr.mxu0 0.0
  %1688 = vmatpush1.msra.mxu0 0.0
  %1689 = vmatprep.subr.mxu0 0.0
  %1690 = vmatpush1.msra.mxu0 0.0
  %1691 = vmatprep.subr.mxu0 0.0
  %1692 = vmatpush1.msra.mxu0 0.0
  %1693 = vmatprep.subr.mxu0 0.0
  %1694 = vmatpush1.msra.mxu0 0.0
  %1695 = vmatprep.subr.mxu0 0.0
  %1696 = vmatpush1.msra.mxu0 0.0
  %1697 = vmatprep.subr.mxu0 0.0
  %1698 = vmatpush1.msra.mxu0 0.0
  %1699 = vmatprep.subr.mxu0 0.0
  %1700 = vmatpush1.msra.mxu0 0.0
  %1701 = vmatprep.subr.mxu0 0.0
  %1702 = vmatpush1.msra.mxu0 0.0
  %1703 = vmatprep.subr.mxu0 0.0
  %1704 = vmatpush1.msra.mxu0 0.0
  %1705 = vmatprep.subr.mxu0 0.0
  %1706 = vmatpush1.msra.mxu0 0.0
  %1707 = vmatprep.subr.mxu0 0.0
  %1708 = vmatpush1.msra.mxu0 0.0
  %1709 = vmatprep.subr.mxu0 0.0
  %1710 = vmatpush1.msra.mxu0 0.0
  %1711 = vmatprep.subr.mxu0 0.0
  %1712 = vmatpush1.msra.mxu0 0.0
  %1713 = vmatprep.subr.mxu0 0.0
  %1714 = vmatpush1.msra.mxu0 0.0
  %1715 = vmatprep.subr.mxu0 0.0
  %1716 = vmatpush1.msra.mxu0 0.0
  %1717 = vmatprep.subr.mxu0 0.0
  %1718 = vmatpush1.msra.mxu0 0.0
  %1719 = vmatprep.mubr.f32.mxu0 0.0
  %1720 = vmatmul.mubr.f32.gmra.mrb[0].mxu0 %v1644
  %v1721 = vpop.f32.mrb[0].mxu0
  %v1722 = vadd.f32 %v1625, %v1721
  %v1723 = vpop.f32.mrb[0].mxu0
  %1724 = vmatprep.mubr.f32.mxu0 0.0
  %1725 = vmatmul.mubr.f32.gmra.mrb[0].mxu0 %v1647
  %v1726 = vpop.f32.mrb[0].mxu0
  %v1727 = vadd.f32 %v1630, %v1726
  %v1728 = vpop.f32.mrb[0].mxu0
  %1729 = vmatprep.mubr.f32.mxu0 0.0
  %1730 = vmatmul.mubr.f32.gmra.mrb[0].mxu0 %v1650
  %v1731 = vpop.f32.mrb[0].mxu0
  %v1732 = vadd.f32 %v1635, %v1731
  %v1733 = vpop.f32.mrb[0].mxu0
  %1734 = vmatprep.mubr.f32.mxu0 0.0
  %1735 = vmatmul.mubr.f32.gmra.mrb[0].mxu0 %v1653
  %v1736 = vpop.f32.mrb[0].mxu0
  %v1737 = vadd.f32 %v1640, %v1736
  %v1738 = vpop.f32.mrb[0].mxu0
  %1739 = vdwg.mxu0
  %v1740 = vld [vmem:[%s4 + $0xd] sm:$0x1]
  %v1741 = vlaneseq
  %v1742 = vshrl.u32 %v1741, 7
  %v1743 = vsub.s32 0, %v1742
  %v1744 = vrot.slane %v1740, %v1743
  %v1745 = vadd.f32 %v1722, %v1744
  %v1746 = vadd.f32 %v1727, %v1744
  %v1747 = vadd.f32 %v1732, %v1744
  %v1748 = vadd.f32 %v1737, %v1744
  %1749 = vrot.lane.b32.xlu0 %v306, 16
  %v1750 = vpop.permute.xlu0 %1749
  %1751 = vrot.lane.b32.xlu0 %v309, 16
  %v1752 = vpop.permute.xlu0 %1751
  %1757 = vrot.lane.b32.xlu0 %v1404, 24
  %v1758 = vpop.permute.xlu0 %1757
  %1759 = vrot.lane.b32.xlu0 %v1406, 24
  %v1760 = vpop.permute.xlu0 %1759
  %1765 = vrot.lane.b32.xlu0 %v1282, 28
  %v1766 = vpop.permute.xlu0 %1765
  %1767 = vrot.lane.b32.xlu0 %v1284, 28
  %v1768 = vpop.permute.xlu0 %1767
  %v1771 = vsel %vm45, %v582, %v1750
  %v1772 = vsel %vm45, %v585, %v1752
  %vm1773 = vcmask 195584
  %v1774 = vsel %vm1773, %v1771, %v1758
  %v1775 = vsel %vm1773, %v1772, %v1760
  %vm1776 = vcmask 228352
  %v1777 = vsel %vm1776, %v1774, %v1766
  %v1778 = vsel %vm1776, %v1775, %v1768
  %v1779 = vsel %vm114, %v1777, 0.0
  %v1780 = vsel %vm114, %v1778, 0.0
  %1781 = vst [vmem:[%s7] sm:$0xff] %v1779
  %1782 = vst [vmem:[%s7 + $0x8] sm:$0xff] %v1780
  %1787 = vrot.lane.b32.xlu0 %v850, 32
  %v1788 = vpop.permute.xlu0 %1787
  %1789 = vrot.lane.b32.xlu0 %v853, 32
  %v1790 = vpop.permute.xlu0 %1789
  %1791 = vrot.lane.b32.xlu0 %v858, 32
  %v1792 = vpop.permute.xlu0 %1791
  %1793 = vrot.lane.b32.xlu0 %v861, 32
  %v1794 = vpop.permute.xlu0 %1793
  %1803 = vrot.lane.b32.xlu0 %v982, 64
  %v1804 = vpop.permute.xlu0 %1803
  %1805 = vrot.lane.b32.xlu0 %v985, 64
  %v1806 = vpop.permute.xlu0 %1805
  %1807 = vrot.lane.b32.xlu0 %v990, 64
  %v1808 = vpop.permute.xlu0 %1807
  %1809 = vrot.lane.b32.xlu0 %v993, 64
  %v1810 = vpop.permute.xlu0 %1809
  %1819 = vrot.lane.b32.xlu0 %v1248, 8
  %v1820 = vpop.permute.xlu0 %1819
  %1821 = vrot.lane.b32.xlu0 %v1251, 8
  %v1822 = vpop.permute.xlu0 %1821
  %1823 = vrot.lane.b32.xlu0 %v1256, 8
  %v1824 = vpop.permute.xlu0 %1823
  %1825 = vrot.lane.b32.xlu0 %v1259, 8
  %v1826 = vpop.permute.xlu0 %1825
  %1835 = vrot.lane.b32.xlu0 %v1745, 12
  %v1836 = vpop.permute.xlu0 %1835
  %1837 = vrot.lane.b32.xlu0 %v1746, 12
  %v1838 = vpop.permute.xlu0 %1837
  %1839 = vrot.lane.b32.xlu0 %v1747, 12
  %v1840 = vpop.permute.xlu0 %1839
  %1841 = vrot.lane.b32.xlu0 %v1748, 12
  %v1842 = vpop.permute.xlu0 %1841
  %v1847 = vsel %vm114, %v718, %v1788
  %v1848 = vsel %vm114, %v721, %v1790
  %v1849 = vsel %vm114, %v726, %v1792
  %v1850 = vsel %vm114, %v729, %v1794
  %v1851 = vsel %vm267, %v1847, %v1804
  %v1852 = vsel %vm267, %v1848, %v1806
  %v1853 = vsel %vm267, %v1849, %v1808
  %v1854 = vsel %vm267, %v1850, %v1810
  %v1855 = vsel %vm319, %v1130, %v1820
  %v1856 = vsel %vm319, %v1133, %v1822
  %v1857 = vsel %vm319, %v1138, %v1824
  %v1858 = vsel %vm319, %v1141, %v1826
  %vm1859 = vcmask 97280
  %v1860 = vsel %vm1859, %v1855, %v1836
  %v1861 = vsel %vm1859, %v1856, %v1838
  %v1862 = vsel %vm1859, %v1857, %v1840
  %v1863 = vsel %vm1859, %v1858, %v1842
  %v1864 = vsel %vm1776, %v1860, 0.0
  %v1865 = vsel %vm1776, %v1861, 0.0
  %v1866 = vsel %vm1776, %v1862, 0.0
  %v1867 = vsel %vm1776, %v1863, 0.0
  %1868 = vst [vmem:[%s8] sm:$0xff] %v1851
  %1869 = vst [vmem:[%s8 + $0x8] sm:$0xff] %v1864
  %1870 = vst [vmem:[%s8 + $0x10] sm:$0xff] %v1852
  %1871 = vst [vmem:[%s8 + $0x18] sm:$0xff] %v1865
  %1872 = vst [vmem:[%s8 + $0x20] sm:$0xff] %v1853
  %1873 = vst [vmem:[%s8 + $0x28] sm:$0xff] %v1866
  %1874 = vst [vmem:[%s8 + $0x30] sm:$0xff] %v1854
  %1875 = vst [vmem:[%s8 + $0x38] sm:$0xff] %v1867
  // Predicated region
  $region30: #{sdcn_forward.1} parent=0 // pred_check
    _
  $region31: #{sdcn_forward.1} parent=0 // pred_check_branch
    %1877 = sbr.rel (0) target = $region33
  $region32: #{sdcn_forward.1} parent=0 // pred_region
    _
  $region33: #{sdcn_forward.1} parent=0 // pred_fallthru
    _
  // Predicated region
  $region34: #{sdcn_forward.1} parent=0 // pred_check
    _
  $region35: #{sdcn_forward.1} parent=0 // pred_check_branch
    %1879 = sbr.rel (0) target = $region37
  $region36: #{sdcn_forward.1} parent=0 // pred_region
    _
  $region37: #{sdcn_forward.1} parent=0 // pred_fallthru
    _
  // Predicated region
  $region38: #{sdcn_forward.1} parent=0 // pred_check
    _
  $region39: #{sdcn_forward.1} parent=0 // pred_check_branch
    %1881 = sbr.rel (0) target = $region41
  $region40: #{sdcn_forward.1} parent=0 // pred_region
    _
  $region41: #{sdcn_forward.1} parent=0 // pred_fallthru
    _
  // Predicated region
  $region42: #{sdcn_forward.1} parent=0 // pred_check
    _
  $region43: #{sdcn_forward.1} parent=0 // pred_check_branch
    %1883 = sbr.rel (0) target = $region45
  $region44: #{sdcn_forward.1} parent=0 // pred_region
    _
  $region45: #{sdcn_forward.1} parent=0 // pred_fallthru
    _

</llo_original>
